<compile_context>
chip_gen: v5e
topology: v5e:2x2
jax: 0.10.0
libtpu: 0.0.40
codegen_flags: <defaults>
</compile_context>

<pallas_src>
import functools

import jax
import jax.numpy as jnp
from jax import lax
from jax.experimental import pallas as pl
from jax.experimental.pallas import tpu as pltpu


# ----------------------------------------------------------------------------
# Helpers
# ----------------------------------------------------------------------------
def _layer_norm(y, g, b, eps):
    mu = jnp.mean(y, axis=-1, keepdims=True)
    yc = y - mu
    var = jnp.mean(yc * yc, axis=-1, keepdims=True)
    return yc * lax.rsqrt(var + eps) * g + b


def _pick_batch_block(B, S, target_rows=256):
    """Largest divisor Bb of B with Bb*S <= target_rows, preferring to leave
    >= 2 grid steps so both v7x TensorCores get work."""
    divisors = [d for d in range(1, B + 1) if B % d == 0]
    fits = [d for d in divisors if d * S <= target_rows] or [1]
    multi = [d for d in fits if B // d >= 2]
    return max(multi) if multi else max(fits)


# ----------------------------------------------------------------------------
# Fused whole-model kernel: lin1 -> N x encoder layer -> lin2
# ----------------------------------------------------------------------------
def _fwd_kernel(x_ref,
                lin1_w_ref, lin1_b_ref,
                wqkv_ref, bqkv_ref, wo_ref, bo_ref,
                g1_ref, b1_ref,
                w1_ref, bf1_ref, w2_ref, bf2_ref,
                g2_ref, b2_ref,
                lin2_w_ref, lin2_b_ref,
                o_ref, *, num_layers, num_heads, eps):
    Bb, S, dm = x_ref.shape
    E = lin1_w_ref.shape[1]
    dh = E // num_heads
    scale = 1.0 / float(dh) ** 0.5
    rows = Bb * S

    # --- input projection: [Bb*S, d_model] @ [d_model, E] ---
    x = x_ref[...].astype(jnp.bfloat16).reshape(rows, dm)
    h = jnp.dot(x, lin1_w_ref[...].astype(jnp.bfloat16),
                preferred_element_type=jnp.float32) + lin1_b_ref[...]

    # --- encoder layers (static unrolled loop; weights VMEM-resident) ---
    for l in range(num_layers):
        # fused QKV projection (one MXU matmul over the whole batch block)
        qkv = jnp.dot(h.astype(jnp.bfloat16),
                      wqkv_ref[l].astype(jnp.bfloat16),
                      preferred_element_type=jnp.float32) + bqkv_ref[l]
        wo = wo_ref[l].astype(jnp.bfloat16)                       # [E, E]

        # per-batch-element attention; out-proj folded into the head loop
        attn_rows = []
        for b in range(Bb):
            r0, r1 = b * S, (b + 1) * S
            q = qkv[r0:r1, :E]
            k = qkv[r0:r1, E:2 * E]
            v = qkv[r0:r1, 2 * E:]
            acc = jnp.zeros((S, E), jnp.float32)
            for hh in range(num_heads):
                sl = slice(hh * dh, (hh + 1) * dh)
                qh = (q[:, sl] * scale).astype(jnp.bfloat16)
                kh = k[:, sl].astype(jnp.bfloat16)
                vh = v[:, sl].astype(jnp.bfloat16)
                # q @ k^T via dot_general contracting feature dims
                s = lax.dot_general(qh, kh, (((1,), (1,)), ((), ())),
                                    preferred_element_type=jnp.float32)
                s = s - jnp.max(s, axis=-1, keepdims=True)
                p = jnp.exp(s)
                p = p * pl.reciprocal(jnp.sum(p, axis=-1, keepdims=True),
                                      approx=True)
                oh = jnp.dot(p.astype(jnp.bfloat16), vh,
                             preferred_element_type=jnp.float32)
                # fold output projection: acc += oh @ Wo[h*dh:(h+1)*dh, :]
                acc = acc + jnp.dot(oh.astype(jnp.bfloat16), wo[sl, :],
                                    preferred_element_type=jnp.float32)
            attn_rows.append(acc)
        attn = attn_rows[0] if Bb == 1 else jnp.concatenate(attn_rows, axis=0)
        attn = attn + bo_ref[l]

        # residual + LayerNorm (post-norm), FFN(ReLU), residual + LayerNorm
        h1 = _layer_norm(h + attn, g1_ref[l], b1_ref[l], eps)
        ff = jnp.dot(h1.astype(jnp.bfloat16),
                     w1_ref[l].astype(jnp.bfloat16),
                     preferred_element_type=jnp.float32) + bf1_ref[l]
        ff = jnp.maximum(ff, 0.0)
        ff = jnp.dot(ff.astype(jnp.bfloat16),
                     w2_ref[l].astype(jnp.bfloat16),
                     preferred_element_type=jnp.float32) + bf2_ref[l]
        h = _layer_norm(h1 + ff, g2_ref[l], b2_ref[l], eps)

    # --- output projection: [Bb*S, E] @ [E, d_model] ---
    out = jnp.dot(h.astype(jnp.bfloat16),
                  lin2_w_ref[...].astype(jnp.bfloat16),
                  preferred_element_type=jnp.float32) + lin2_b_ref[...]
    o_ref[...] = out.reshape(Bb, S, dm).astype(o_ref.dtype)


# ----------------------------------------------------------------------------
# Wrapper
# ----------------------------------------------------------------------------
def transformer_rationale_predictor(x, params, num_heads, eps=1e-5):
    B, S, dm = x.shape
    L = params["in_proj_w"].shape[0]
    Bb = _pick_batch_block(B, S)

    x_spec = pl.BlockSpec((Bb, S, dm), lambda i: (i, 0, 0))

    def w_spec(arr):
        nd = arr.ndim
        # Constant block index across the grid -> weight stays VMEM-resident.
        return pl.BlockSpec(arr.shape, lambda i, _nd=nd: (0,) * _nd)

    weight_order = [
        "lin1_w", "lin1_b",
        "in_proj_w", "in_proj_b", "out_proj_w", "out_proj_b",
        "ln1_g", "ln1_b",
        "ff1_w", "ff1_b", "ff2_w", "ff2_b",
        "ln2_g", "ln2_b",
        "lin2_w", "lin2_b",
    ]
    weights = [params[name] for name in weight_order]

    kernel = functools.partial(_fwd_kernel, num_layers=L,
                               num_heads=num_heads, eps=eps)
    return pl.pallas_call(
        kernel,
        grid=(B // Bb,),
        in_specs=[x_spec] + [w_spec(w) for w in weights],
        out_specs=x_spec,
        out_shape=jax.ShapeDtypeStruct((B, S, dm), x.dtype),
        compiler_params=pltpu.CompilerParams(
            dimension_semantics=("parallel",),
            # Raises v5e's 16 MiB default scoped VMEM; matches v6e/v7x default.
            vmem_limit_bytes=32 << 20),
    )(x, *weights)


# ----------------------------------------------------------------------------
# Deterministic parameter initialization (shapes from the module __init__).
# Layer weights stacked along a leading [num_layers] axis; matmul weights are
# stored bf16 (MXU inputs), biases / LayerNorm params f32, already shaped for
# in-kernel broadcasting ([L, 1, X] / [1, X]).
# ----------------------------------------------------------------------------
def init_params(key, num_layers, d_model, num_heads, dff):
    E = d_model * num_heads
    L = num_layers
    scale = 0.05

    def nrm(k, shape, dtype=jnp.float32):
        return (scale * jax.random.normal(k, shape, jnp.float32)).astype(dtype)

    keys = jax.random.split(key, 12)
    return {
        "lin1_w": nrm(keys[0], (d_model, E), jnp.bfloat16),
        "lin1_b": nrm(keys[1], (1, E)),
        "lin2_w": nrm(keys[2], (E, d_model), jnp.bfloat16),
        "lin2_b": nrm(keys[3], (1, d_model)),
        "in_proj_w": nrm(keys[4], (L, E, 3 * E), jnp.bfloat16),
        "in_proj_b": nrm(keys[5], (L, 1, 3 * E)),
        "out_proj_w": nrm(keys[6], (L, E, E), jnp.bfloat16),
        "out_proj_b": nrm(keys[7], (L, 1, E)),
        "ln1_g": jnp.ones((L, 1, E), jnp.float32),
        "ln1_b": jnp.zeros((L, 1, E), jnp.float32),
        "ff1_w": nrm(keys[8], (L, E, dff), jnp.bfloat16),
        "ff1_b": nrm(keys[9], (L, 1, dff)),
        "ff2_w": nrm(keys[10], (L, dff, E), jnp.bfloat16),
        "ff2_b": nrm(keys[11], (L, 1, E)),
        "ln2_g": jnp.ones((L, 1, E), jnp.float32),
        "ln2_b": jnp.zeros((L, 1, E), jnp.float32),
    }


# ----------------------------------------------------------------------------
if __name__ == "__main__":
    num_layers = 2
    d_model = 8
    num_heads = 4
    dff = 64
    batch, seq = 2, 8

    root = jax.random.PRNGKey(0)
    pkey, xkey = jax.random.split(root)
    params = init_params(pkey, num_layers, d_model, num_heads, dff)
    x = jax.random.normal(xkey, (batch, seq, d_model), jnp.float32)

    fwd = jax.jit(functools.partial(transformer_rationale_predictor,
                                    num_heads=num_heads))
    out = fwd(x, params)
    jax.block_until_ready(out)

    assert out.shape == (batch, seq, d_model)
    assert out.dtype == jnp.float32
    assert bool(jnp.all(jnp.isfinite(out)))
    print("KERNEL_OK")
</pallas_src>

<mosaic_0001>
module attributes {stable_mosaic.version = 11 : i64} {
  func.func @_fwd_kernel(%arg0: i32, %arg1: memref<1x8x8xf32, #tpu.memory_space<vmem>>, %arg2: memref<8x32xbf16, #tpu.memory_space<vmem>>, %arg3: memref<1x32xf32, #tpu.memory_space<vmem>>, %arg4: memref<2x32x96xbf16, #tpu.memory_space<vmem>>, %arg5: memref<2x1x96xf32, #tpu.memory_space<vmem>>, %arg6: memref<2x32x32xbf16, #tpu.memory_space<vmem>>, %arg7: memref<2x1x32xf32, #tpu.memory_space<vmem>>, %arg8: memref<2x1x32xf32, #tpu.memory_space<vmem>>, %arg9: memref<2x1x32xf32, #tpu.memory_space<vmem>>, %arg10: memref<2x32x64xbf16, #tpu.memory_space<vmem>>, %arg11: memref<2x1x64xf32, #tpu.memory_space<vmem>>, %arg12: memref<2x64x32xbf16, #tpu.memory_space<vmem>>, %arg13: memref<2x1x32xf32, #tpu.memory_space<vmem>>, %arg14: memref<2x1x32xf32, #tpu.memory_space<vmem>>, %arg15: memref<2x1x32xf32, #tpu.memory_space<vmem>>, %arg16: memref<32x8xbf16, #tpu.memory_space<vmem>>, %arg17: memref<1x8xf32, #tpu.memory_space<vmem>>, %arg18: memref<1x8x8xf32, #tpu.memory_space<vmem>>) attributes {dimension_semantics = [#tpu.dimension_semantics<parallel>], iteration_bounds = array<i64: 2>, scalar_prefetch = 0 : i64, scratch_operands = 0 : i64, tpu.core_type = #tpu.core_type<tc>, window_params = [{transform_indices = @transform_0, window_bounds = array<i64: 1, 8, 8>}, {pipeline_mode = #tpu.pipeline_mode<synchronous>, transform_indices = @transform_1, window_bounds = array<i64: 8, 32>}, {pipeline_mode = #tpu.pipeline_mode<synchronous>, transform_indices = @transform_2, window_bounds = array<i64: 1, 32>}, {pipeline_mode = #tpu.pipeline_mode<synchronous>, transform_indices = @transform_3, window_bounds = array<i64: 2, 32, 96>}, {pipeline_mode = #tpu.pipeline_mode<synchronous>, transform_indices = @transform_4, window_bounds = array<i64: 2, 1, 96>}, {pipeline_mode = #tpu.pipeline_mode<synchronous>, transform_indices = @transform_5, window_bounds = array<i64: 2, 32, 32>}, {pipeline_mode = #tpu.pipeline_mode<synchronous>, transform_indices = @transform_6, window_bounds = array<i64: 2, 1, 32>}, {pipeline_mode = #tpu.pipeline_mode<synchronous>, transform_indices = @transform_7, window_bounds = array<i64: 2, 1, 32>}, {pipeline_mode = #tpu.pipeline_mode<synchronous>, transform_indices = @transform_8, window_bounds = array<i64: 2, 1, 32>}, {pipeline_mode = #tpu.pipeline_mode<synchronous>, transform_indices = @transform_9, window_bounds = array<i64: 2, 32, 64>}, {pipeline_mode = #tpu.pipeline_mode<synchronous>, transform_indices = @transform_10, window_bounds = array<i64: 2, 1, 64>}, {pipeline_mode = #tpu.pipeline_mode<synchronous>, transform_indices = @transform_11, window_bounds = array<i64: 2, 64, 32>}, {pipeline_mode = #tpu.pipeline_mode<synchronous>, transform_indices = @transform_12, window_bounds = array<i64: 2, 1, 32>}, {pipeline_mode = #tpu.pipeline_mode<synchronous>, transform_indices = @transform_13, window_bounds = array<i64: 2, 1, 32>}, {pipeline_mode = #tpu.pipeline_mode<synchronous>, transform_indices = @transform_14, window_bounds = array<i64: 2, 1, 32>}, {pipeline_mode = #tpu.pipeline_mode<synchronous>, transform_indices = @transform_15, window_bounds = array<i64: 32, 8>}, {pipeline_mode = #tpu.pipeline_mode<synchronous>, transform_indices = @transform_16, window_bounds = array<i64: 1, 8>}, {transform_indices = @transform_17, window_bounds = array<i64: 1, 8, 8>}]} {
    %c0 = arith.constant 0 : index
    %c0_0 = arith.constant 0 : index
    %c0_1 = arith.constant 0 : index
    %0 = vector.load %arg1[%c0, %c0_0, %c0_1] : memref<1x8x8xf32, #tpu.memory_space<vmem>>, vector<1x8x8xf32>
    %1 = arith.truncf %0 : vector<1x8x8xf32> to vector<1x8x8xbf16>
    %2 = vector.shape_cast %1 : vector<1x8x8xbf16> to vector<8x8xbf16>
    %c0_2 = arith.constant 0 : index
    %c0_3 = arith.constant 0 : index
    %3 = vector.load %arg2[%c0_2, %c0_3] : memref<8x32xbf16, #tpu.memory_space<vmem>>, vector<8x32xbf16>
    %cst = arith.constant dense<0.000000e+00> : vector<8x32xf32>
    %4 = tpu.matmul %2, %3, %cst {dimension_numbers = #tpu.dot_dimension_numbers<[1], [0], [0], [1], [0, 0, 1, 1], [], []>} : vector<8x8xbf16>, vector<8x32xbf16>, vector<8x32xf32> -> vector<8x32xf32>
    %c0_4 = arith.constant 0 : index
    %c0_5 = arith.constant 0 : index
    %5 = vector.load %arg3[%c0_4, %c0_5] : memref<1x32xf32, #tpu.memory_space<vmem>>, vector<1x32xf32>
    %6 = vector.broadcast %5 : vector<1x32xf32> to vector<8x32xf32>
    %7 = arith.addf %4, %6 : vector<8x32xf32>
    %8 = arith.truncf %7 : vector<8x32xf32> to vector<8x32xbf16>
    %c0_6 = arith.constant 0 : index
    %c0_7 = arith.constant 0 : index
    %c0_8 = arith.constant 0 : index
    %9 = vector.load %arg4[%c0_6, %c0_7, %c0_8] : memref<2x32x96xbf16, #tpu.memory_space<vmem>>, vector<1x32x96xbf16>
    %10 = vector.shape_cast %9 : vector<1x32x96xbf16> to vector<32x96xbf16>
    %cst_9 = arith.constant dense<0.000000e+00> : vector<8x96xf32>
    %11 = tpu.matmul %8, %10, %cst_9 {dimension_numbers = #tpu.dot_dimension_numbers<[1], [0], [0], [1], [0, 0, 1, 1], [], []>} : vector<8x32xbf16>, vector<32x96xbf16>, vector<8x96xf32> -> vector<8x96xf32>
    %c0_10 = arith.constant 0 : index
    %c0_11 = arith.constant 0 : index
    %c0_12 = arith.constant 0 : index
    %12 = vector.load %arg5[%c0_10, %c0_11, %c0_12] : memref<2x1x96xf32, #tpu.memory_space<vmem>>, vector<1x1x96xf32>
    %13 = vector.shape_cast %12 : vector<1x1x96xf32> to vector<1x96xf32>
    %14 = vector.broadcast %13 : vector<1x96xf32> to vector<8x96xf32>
    %15 = arith.addf %11, %14 : vector<8x96xf32>
    %c0_13 = arith.constant 0 : index
    %c0_14 = arith.constant 0 : index
    %c0_15 = arith.constant 0 : index
    %16 = vector.load %arg6[%c0_13, %c0_14, %c0_15] : memref<2x32x32xbf16, #tpu.memory_space<vmem>>, vector<1x32x32xbf16>
    %17 = vector.shape_cast %16 : vector<1x32x32xbf16> to vector<32x32xbf16>
    %18 = vector.extract_strided_slice %15 {offsets = [0, 0], sizes = [8, 32], strides = [1, 1]} : vector<8x96xf32> to vector<8x32xf32>
    %19 = vector.extract_strided_slice %15 {offsets = [0, 32], sizes = [8, 32], strides = [1, 1]} : vector<8x96xf32> to vector<8x32xf32>
    %20 = vector.extract_strided_slice %15 {offsets = [0, 64], sizes = [8, 32], strides = [1, 1]} : vector<8x96xf32> to vector<8x32xf32>
    %cst_16 = arith.constant 0.000000e+00 : f32
    %21 = vector.broadcast %cst_16 : f32 to vector<8x32xf32>
    %22 = vector.extract_strided_slice %18 {offsets = [0, 0], sizes = [8, 8], strides = [1, 1]} : vector<8x32xf32> to vector<8x8xf32>
    %cst_17 = arith.constant 0.353553385 : f32
    %23 = vector.broadcast %cst_17 : f32 to vector<8x8xf32>
    %24 = arith.mulf %22, %23 : vector<8x8xf32>
    %25 = arith.truncf %24 : vector<8x8xf32> to vector<8x8xbf16>
    %26 = vector.extract_strided_slice %19 {offsets = [0, 0], sizes = [8, 8], strides = [1, 1]} : vector<8x32xf32> to vector<8x8xf32>
    %27 = arith.truncf %26 : vector<8x8xf32> to vector<8x8xbf16>
    %28 = vector.extract_strided_slice %20 {offsets = [0, 0], sizes = [8, 8], strides = [1, 1]} : vector<8x32xf32> to vector<8x8xf32>
    %29 = arith.truncf %28 : vector<8x8xf32> to vector<8x8xbf16>
    %cst_18 = arith.constant dense<0.000000e+00> : vector<8x8xf32>
    %30 = tpu.matmul %25, %27, %cst_18 {dimension_numbers = #tpu.dot_dimension_numbers<[1], [1], [0], [0], [0, 0, 1, 0], [], []>} : vector<8x8xbf16>, vector<8x8xbf16>, vector<8x8xf32> -> vector<8x8xf32>
    %cst_19 = arith.constant dense<0xFF800000> : vector<8xf32>
    %31 = vector.multi_reduction <maximumf>, %30, %cst_19 [1] : vector<8x8xf32> to vector<8xf32>
    %32 = vector.shape_cast %31 : vector<8xf32> to vector<8x1xf32>
    %33 = vector.broadcast %32 : vector<8x1xf32> to vector<8x8xf32>
    %34 = arith.subf %30, %33 : vector<8x8xf32>
    %35 = math.exp %34 : vector<8x8xf32>
    %cst_20 = arith.constant dense<0.000000e+00> : vector<8xf32>
    %36 = vector.multi_reduction <add>, %35, %cst_20 [1] : vector<8x8xf32> to vector<8xf32>
    %37 = vector.shape_cast %36 : vector<8xf32> to vector<8x1xf32>
    %38 = tpu.reciprocal %37 {approx = true} : vector<8x1xf32> -> vector<8x1xf32>
    %39 = vector.broadcast %38 : vector<8x1xf32> to vector<8x8xf32>
    %40 = arith.mulf %35, %39 : vector<8x8xf32>
    %41 = arith.truncf %40 : vector<8x8xf32> to vector<8x8xbf16>
    %cst_21 = arith.constant dense<0.000000e+00> : vector<8x8xf32>
    %42 = tpu.matmul %41, %29, %cst_21 {dimension_numbers = #tpu.dot_dimension_numbers<[1], [0], [0], [1], [0, 0, 1, 1], [], []>} : vector<8x8xbf16>, vector<8x8xbf16>, vector<8x8xf32> -> vector<8x8xf32>
    %43 = arith.truncf %42 : vector<8x8xf32> to vector<8x8xbf16>
    %44 = vector.extract_strided_slice %17 {offsets = [0, 0], sizes = [8, 32], strides = [1, 1]} : vector<32x32xbf16> to vector<8x32xbf16>
    %cst_22 = arith.constant dense<0.000000e+00> : vector<8x32xf32>
    %45 = tpu.matmul %43, %44, %cst_22 {dimension_numbers = #tpu.dot_dimension_numbers<[1], [0], [0], [1], [0, 0, 1, 1], [], []>} : vector<8x8xbf16>, vector<8x32xbf16>, vector<8x32xf32> -> vector<8x32xf32>
    %46 = arith.addf %21, %45 : vector<8x32xf32>
    %47 = vector.extract_strided_slice %18 {offsets = [0, 8], sizes = [8, 8], strides = [1, 1]} : vector<8x32xf32> to vector<8x8xf32>
    %cst_23 = arith.constant 0.353553385 : f32
    %48 = vector.broadcast %cst_23 : f32 to vector<8x8xf32>
    %49 = arith.mulf %47, %48 : vector<8x8xf32>
    %50 = arith.truncf %49 : vector<8x8xf32> to vector<8x8xbf16>
    %51 = vector.extract_strided_slice %19 {offsets = [0, 8], sizes = [8, 8], strides = [1, 1]} : vector<8x32xf32> to vector<8x8xf32>
    %52 = arith.truncf %51 : vector<8x8xf32> to vector<8x8xbf16>
    %53 = vector.extract_strided_slice %20 {offsets = [0, 8], sizes = [8, 8], strides = [1, 1]} : vector<8x32xf32> to vector<8x8xf32>
    %54 = arith.truncf %53 : vector<8x8xf32> to vector<8x8xbf16>
    %cst_24 = arith.constant dense<0.000000e+00> : vector<8x8xf32>
    %55 = tpu.matmul %50, %52, %cst_24 {dimension_numbers = #tpu.dot_dimension_numbers<[1], [1], [0], [0], [0, 0, 1, 0], [], []>} : vector<8x8xbf16>, vector<8x8xbf16>, vector<8x8xf32> -> vector<8x8xf32>
    %cst_25 = arith.constant dense<0xFF800000> : vector<8xf32>
    %56 = vector.multi_reduction <maximumf>, %55, %cst_25 [1] : vector<8x8xf32> to vector<8xf32>
    %57 = vector.shape_cast %56 : vector<8xf32> to vector<8x1xf32>
    %58 = vector.broadcast %57 : vector<8x1xf32> to vector<8x8xf32>
    %59 = arith.subf %55, %58 : vector<8x8xf32>
    %60 = math.exp %59 : vector<8x8xf32>
    %cst_26 = arith.constant dense<0.000000e+00> : vector<8xf32>
    %61 = vector.multi_reduction <add>, %60, %cst_26 [1] : vector<8x8xf32> to vector<8xf32>
    %62 = vector.shape_cast %61 : vector<8xf32> to vector<8x1xf32>
    %63 = tpu.reciprocal %62 {approx = true} : vector<8x1xf32> -> vector<8x1xf32>
    %64 = vector.broadcast %63 : vector<8x1xf32> to vector<8x8xf32>
    %65 = arith.mulf %60, %64 : vector<8x8xf32>
    %66 = arith.truncf %65 : vector<8x8xf32> to vector<8x8xbf16>
    %cst_27 = arith.constant dense<0.000000e+00> : vector<8x8xf32>
    %67 = tpu.matmul %66, %54, %cst_27 {dimension_numbers = #tpu.dot_dimension_numbers<[1], [0], [0], [1], [0, 0, 1, 1], [], []>} : vector<8x8xbf16>, vector<8x8xbf16>, vector<8x8xf32> -> vector<8x8xf32>
    %68 = arith.truncf %67 : vector<8x8xf32> to vector<8x8xbf16>
    %69 = vector.extract_strided_slice %17 {offsets = [8, 0], sizes = [8, 32], strides = [1, 1]} : vector<32x32xbf16> to vector<8x32xbf16>
    %cst_28 = arith.constant dense<0.000000e+00> : vector<8x32xf32>
    %70 = tpu.matmul %68, %69, %cst_28 {dimension_numbers = #tpu.dot_dimension_numbers<[1], [0], [0], [1], [0, 0, 1, 1], [], []>} : vector<8x8xbf16>, vector<8x32xbf16>, vector<8x32xf32> -> vector<8x32xf32>
    %71 = arith.addf %46, %70 : vector<8x32xf32>
    %72 = vector.extract_strided_slice %18 {offsets = [0, 16], sizes = [8, 8], strides = [1, 1]} : vector<8x32xf32> to vector<8x8xf32>
    %cst_29 = arith.constant 0.353553385 : f32
    %73 = vector.broadcast %cst_29 : f32 to vector<8x8xf32>
    %74 = arith.mulf %72, %73 : vector<8x8xf32>
    %75 = arith.truncf %74 : vector<8x8xf32> to vector<8x8xbf16>
    %76 = vector.extract_strided_slice %19 {offsets = [0, 16], sizes = [8, 8], strides = [1, 1]} : vector<8x32xf32> to vector<8x8xf32>
    %77 = arith.truncf %76 : vector<8x8xf32> to vector<8x8xbf16>
    %78 = vector.extract_strided_slice %20 {offsets = [0, 16], sizes = [8, 8], strides = [1, 1]} : vector<8x32xf32> to vector<8x8xf32>
    %79 = arith.truncf %78 : vector<8x8xf32> to vector<8x8xbf16>
    %cst_30 = arith.constant dense<0.000000e+00> : vector<8x8xf32>
    %80 = tpu.matmul %75, %77, %cst_30 {dimension_numbers = #tpu.dot_dimension_numbers<[1], [1], [0], [0], [0, 0, 1, 0], [], []>} : vector<8x8xbf16>, vector<8x8xbf16>, vector<8x8xf32> -> vector<8x8xf32>
    %cst_31 = arith.constant dense<0xFF800000> : vector<8xf32>
    %81 = vector.multi_reduction <maximumf>, %80, %cst_31 [1] : vector<8x8xf32> to vector<8xf32>
    %82 = vector.shape_cast %81 : vector<8xf32> to vector<8x1xf32>
    %83 = vector.broadcast %82 : vector<8x1xf32> to vector<8x8xf32>
    %84 = arith.subf %80, %83 : vector<8x8xf32>
    %85 = math.exp %84 : vector<8x8xf32>
    %cst_32 = arith.constant dense<0.000000e+00> : vector<8xf32>
    %86 = vector.multi_reduction <add>, %85, %cst_32 [1] : vector<8x8xf32> to vector<8xf32>
    %87 = vector.shape_cast %86 : vector<8xf32> to vector<8x1xf32>
    %88 = tpu.reciprocal %87 {approx = true} : vector<8x1xf32> -> vector<8x1xf32>
    %89 = vector.broadcast %88 : vector<8x1xf32> to vector<8x8xf32>
    %90 = arith.mulf %85, %89 : vector<8x8xf32>
    %91 = arith.truncf %90 : vector<8x8xf32> to vector<8x8xbf16>
    %cst_33 = arith.constant dense<0.000000e+00> : vector<8x8xf32>
    %92 = tpu.matmul %91, %79, %cst_33 {dimension_numbers = #tpu.dot_dimension_numbers<[1], [0], [0], [1], [0, 0, 1, 1], [], []>} : vector<8x8xbf16>, vector<8x8xbf16>, vector<8x8xf32> -> vector<8x8xf32>
    %93 = arith.truncf %92 : vector<8x8xf32> to vector<8x8xbf16>
    %94 = vector.extract_strided_slice %17 {offsets = [16, 0], sizes = [8, 32], strides = [1, 1]} : vector<32x32xbf16> to vector<8x32xbf16>
    %cst_34 = arith.constant dense<0.000000e+00> : vector<8x32xf32>
    %95 = tpu.matmul %93, %94, %cst_34 {dimension_numbers = #tpu.dot_dimension_numbers<[1], [0], [0], [1], [0, 0, 1, 1], [], []>} : vector<8x8xbf16>, vector<8x32xbf16>, vector<8x32xf32> -> vector<8x32xf32>
    %96 = arith.addf %71, %95 : vector<8x32xf32>
    %97 = vector.extract_strided_slice %18 {offsets = [0, 24], sizes = [8, 8], strides = [1, 1]} : vector<8x32xf32> to vector<8x8xf32>
    %cst_35 = arith.constant 0.353553385 : f32
    %98 = vector.broadcast %cst_35 : f32 to vector<8x8xf32>
    %99 = arith.mulf %97, %98 : vector<8x8xf32>
    %100 = arith.truncf %99 : vector<8x8xf32> to vector<8x8xbf16>
    %101 = vector.extract_strided_slice %19 {offsets = [0, 24], sizes = [8, 8], strides = [1, 1]} : vector<8x32xf32> to vector<8x8xf32>
    %102 = arith.truncf %101 : vector<8x8xf32> to vector<8x8xbf16>
    %103 = vector.extract_strided_slice %20 {offsets = [0, 24], sizes = [8, 8], strides = [1, 1]} : vector<8x32xf32> to vector<8x8xf32>
    %104 = arith.truncf %103 : vector<8x8xf32> to vector<8x8xbf16>
    %cst_36 = arith.constant dense<0.000000e+00> : vector<8x8xf32>
    %105 = tpu.matmul %100, %102, %cst_36 {dimension_numbers = #tpu.dot_dimension_numbers<[1], [1], [0], [0], [0, 0, 1, 0], [], []>} : vector<8x8xbf16>, vector<8x8xbf16>, vector<8x8xf32> -> vector<8x8xf32>
    %cst_37 = arith.constant dense<0xFF800000> : vector<8xf32>
    %106 = vector.multi_reduction <maximumf>, %105, %cst_37 [1] : vector<8x8xf32> to vector<8xf32>
    %107 = vector.shape_cast %106 : vector<8xf32> to vector<8x1xf32>
    %108 = vector.broadcast %107 : vector<8x1xf32> to vector<8x8xf32>
    %109 = arith.subf %105, %108 : vector<8x8xf32>
    %110 = math.exp %109 : vector<8x8xf32>
    %cst_38 = arith.constant dense<0.000000e+00> : vector<8xf32>
    %111 = vector.multi_reduction <add>, %110, %cst_38 [1] : vector<8x8xf32> to vector<8xf32>
    %112 = vector.shape_cast %111 : vector<8xf32> to vector<8x1xf32>
    %113 = tpu.reciprocal %112 {approx = true} : vector<8x1xf32> -> vector<8x1xf32>
    %114 = vector.broadcast %113 : vector<8x1xf32> to vector<8x8xf32>
    %115 = arith.mulf %110, %114 : vector<8x8xf32>
    %116 = arith.truncf %115 : vector<8x8xf32> to vector<8x8xbf16>
    %cst_39 = arith.constant dense<0.000000e+00> : vector<8x8xf32>
    %117 = tpu.matmul %116, %104, %cst_39 {dimension_numbers = #tpu.dot_dimension_numbers<[1], [0], [0], [1], [0, 0, 1, 1], [], []>} : vector<8x8xbf16>, vector<8x8xbf16>, vector<8x8xf32> -> vector<8x8xf32>
    %118 = arith.truncf %117 : vector<8x8xf32> to vector<8x8xbf16>
    %119 = vector.extract_strided_slice %17 {offsets = [24, 0], sizes = [8, 32], strides = [1, 1]} : vector<32x32xbf16> to vector<8x32xbf16>
    %cst_40 = arith.constant dense<0.000000e+00> : vector<8x32xf32>
    %120 = tpu.matmul %118, %119, %cst_40 {dimension_numbers = #tpu.dot_dimension_numbers<[1], [0], [0], [1], [0, 0, 1, 1], [], []>} : vector<8x8xbf16>, vector<8x32xbf16>, vector<8x32xf32> -> vector<8x32xf32>
    %121 = arith.addf %96, %120 : vector<8x32xf32>
    %c0_41 = arith.constant 0 : index
    %c0_42 = arith.constant 0 : index
    %c0_43 = arith.constant 0 : index
    %122 = vector.load %arg7[%c0_41, %c0_42, %c0_43] : memref<2x1x32xf32, #tpu.memory_space<vmem>>, vector<1x1x32xf32>
    %123 = vector.shape_cast %122 : vector<1x1x32xf32> to vector<1x32xf32>
    %124 = vector.broadcast %123 : vector<1x32xf32> to vector<8x32xf32>
    %125 = arith.addf %121, %124 : vector<8x32xf32>
    %126 = arith.addf %7, %125 : vector<8x32xf32>
    %c0_44 = arith.constant 0 : index
    %c0_45 = arith.constant 0 : index
    %c0_46 = arith.constant 0 : index
    %127 = vector.load %arg8[%c0_44, %c0_45, %c0_46] : memref<2x1x32xf32, #tpu.memory_space<vmem>>, vector<1x1x32xf32>
    %128 = vector.shape_cast %127 : vector<1x1x32xf32> to vector<1x32xf32>
    %c0_47 = arith.constant 0 : index
    %c0_48 = arith.constant 0 : index
    %c0_49 = arith.constant 0 : index
    %129 = vector.load %arg9[%c0_47, %c0_48, %c0_49] : memref<2x1x32xf32, #tpu.memory_space<vmem>>, vector<1x1x32xf32>
    %130 = vector.shape_cast %129 : vector<1x1x32xf32> to vector<1x32xf32>
    %cst_50 = arith.constant dense<0.000000e+00> : vector<8xf32>
    %131 = vector.multi_reduction <add>, %126, %cst_50 [1] : vector<8x32xf32> to vector<8xf32>
    %132 = vector.shape_cast %131 : vector<8xf32> to vector<8x1xf32>
    %cst_51 = arith.constant 3.200000e+01 : f32
    %133 = vector.broadcast %cst_51 : f32 to vector<8x1xf32>
    %134 = arith.divf %132, %133 : vector<8x1xf32>
    %135 = vector.broadcast %134 : vector<8x1xf32> to vector<8x32xf32>
    %136 = arith.subf %126, %135 : vector<8x32xf32>
    %137 = arith.mulf %136, %136 : vector<8x32xf32>
    %cst_52 = arith.constant dense<0.000000e+00> : vector<8xf32>
    %138 = vector.multi_reduction <add>, %137, %cst_52 [1] : vector<8x32xf32> to vector<8xf32>
    %139 = vector.shape_cast %138 : vector<8xf32> to vector<8x1xf32>
    %cst_53 = arith.constant 3.200000e+01 : f32
    %140 = vector.broadcast %cst_53 : f32 to vector<8x1xf32>
    %141 = arith.divf %139, %140 : vector<8x1xf32>
    %cst_54 = arith.constant 9.99999974E-6 : f32
    %142 = vector.broadcast %cst_54 : f32 to vector<8x1xf32>
    %143 = arith.addf %141, %142 : vector<8x1xf32>
    %144 = math.rsqrt %143 : vector<8x1xf32>
    %145 = vector.broadcast %144 : vector<8x1xf32> to vector<8x32xf32>
    %146 = arith.mulf %136, %145 : vector<8x32xf32>
    %147 = vector.broadcast %128 : vector<1x32xf32> to vector<8x32xf32>
    %148 = arith.mulf %146, %147 : vector<8x32xf32>
    %149 = vector.broadcast %130 : vector<1x32xf32> to vector<8x32xf32>
    %150 = arith.addf %148, %149 : vector<8x32xf32>
    %151 = arith.truncf %150 : vector<8x32xf32> to vector<8x32xbf16>
    %c0_55 = arith.constant 0 : index
    %c0_56 = arith.constant 0 : index
    %c0_57 = arith.constant 0 : index
    %152 = vector.load %arg10[%c0_55, %c0_56, %c0_57] : memref<2x32x64xbf16, #tpu.memory_space<vmem>>, vector<1x32x64xbf16>
    %153 = vector.shape_cast %152 : vector<1x32x64xbf16> to vector<32x64xbf16>
    %cst_58 = arith.constant dense<0.000000e+00> : vector<8x64xf32>
    %154 = tpu.matmul %151, %153, %cst_58 {dimension_numbers = #tpu.dot_dimension_numbers<[1], [0], [0], [1], [0, 0, 1, 1], [], []>} : vector<8x32xbf16>, vector<32x64xbf16>, vector<8x64xf32> -> vector<8x64xf32>
    %c0_59 = arith.constant 0 : index
    %c0_60 = arith.constant 0 : index
    %c0_61 = arith.constant 0 : index
    %155 = vector.load %arg11[%c0_59, %c0_60, %c0_61] : memref<2x1x64xf32, #tpu.memory_space<vmem>>, vector<1x1x64xf32>
    %156 = vector.shape_cast %155 : vector<1x1x64xf32> to vector<1x64xf32>
    %157 = vector.broadcast %156 : vector<1x64xf32> to vector<8x64xf32>
    %158 = arith.addf %154, %157 : vector<8x64xf32>
    %cst_62 = arith.constant 0.000000e+00 : f32
    %159 = vector.broadcast %cst_62 : f32 to vector<8x64xf32>
    %160 = arith.maximumf %158, %159 : vector<8x64xf32>
    %161 = arith.truncf %160 : vector<8x64xf32> to vector<8x64xbf16>
    %c0_63 = arith.constant 0 : index
    %c0_64 = arith.constant 0 : index
    %c0_65 = arith.constant 0 : index
    %162 = vector.load %arg12[%c0_63, %c0_64, %c0_65] : memref<2x64x32xbf16, #tpu.memory_space<vmem>>, vector<1x64x32xbf16>
    %163 = vector.shape_cast %162 : vector<1x64x32xbf16> to vector<64x32xbf16>
    %cst_66 = arith.constant dense<0.000000e+00> : vector<8x32xf32>
    %164 = tpu.matmul %161, %163, %cst_66 {dimension_numbers = #tpu.dot_dimension_numbers<[1], [0], [0], [1], [0, 0, 1, 1], [], []>} : vector<8x64xbf16>, vector<64x32xbf16>, vector<8x32xf32> -> vector<8x32xf32>
    %c0_67 = arith.constant 0 : index
    %c0_68 = arith.constant 0 : index
    %c0_69 = arith.constant 0 : index
    %165 = vector.load %arg13[%c0_67, %c0_68, %c0_69] : memref<2x1x32xf32, #tpu.memory_space<vmem>>, vector<1x1x32xf32>
    %166 = vector.shape_cast %165 : vector<1x1x32xf32> to vector<1x32xf32>
    %167 = vector.broadcast %166 : vector<1x32xf32> to vector<8x32xf32>
    %168 = arith.addf %164, %167 : vector<8x32xf32>
    %169 = arith.addf %150, %168 : vector<8x32xf32>
    %c0_70 = arith.constant 0 : index
    %c0_71 = arith.constant 0 : index
    %c0_72 = arith.constant 0 : index
    %170 = vector.load %arg14[%c0_70, %c0_71, %c0_72] : memref<2x1x32xf32, #tpu.memory_space<vmem>>, vector<1x1x32xf32>
    %171 = vector.shape_cast %170 : vector<1x1x32xf32> to vector<1x32xf32>
    %c0_73 = arith.constant 0 : index
    %c0_74 = arith.constant 0 : index
    %c0_75 = arith.constant 0 : index
    %172 = vector.load %arg15[%c0_73, %c0_74, %c0_75] : memref<2x1x32xf32, #tpu.memory_space<vmem>>, vector<1x1x32xf32>
    %173 = vector.shape_cast %172 : vector<1x1x32xf32> to vector<1x32xf32>
    %cst_76 = arith.constant dense<0.000000e+00> : vector<8xf32>
    %174 = vector.multi_reduction <add>, %169, %cst_76 [1] : vector<8x32xf32> to vector<8xf32>
    %175 = vector.shape_cast %174 : vector<8xf32> to vector<8x1xf32>
    %cst_77 = arith.constant 3.200000e+01 : f32
    %176 = vector.broadcast %cst_77 : f32 to vector<8x1xf32>
    %177 = arith.divf %175, %176 : vector<8x1xf32>
    %178 = vector.broadcast %177 : vector<8x1xf32> to vector<8x32xf32>
    %179 = arith.subf %169, %178 : vector<8x32xf32>
    %180 = arith.mulf %179, %179 : vector<8x32xf32>
    %cst_78 = arith.constant dense<0.000000e+00> : vector<8xf32>
    %181 = vector.multi_reduction <add>, %180, %cst_78 [1] : vector<8x32xf32> to vector<8xf32>
    %182 = vector.shape_cast %181 : vector<8xf32> to vector<8x1xf32>
    %cst_79 = arith.constant 3.200000e+01 : f32
    %183 = vector.broadcast %cst_79 : f32 to vector<8x1xf32>
    %184 = arith.divf %182, %183 : vector<8x1xf32>
    %cst_80 = arith.constant 9.99999974E-6 : f32
    %185 = vector.broadcast %cst_80 : f32 to vector<8x1xf32>
    %186 = arith.addf %184, %185 : vector<8x1xf32>
    %187 = math.rsqrt %186 : vector<8x1xf32>
    %188 = vector.broadcast %187 : vector<8x1xf32> to vector<8x32xf32>
    %189 = arith.mulf %179, %188 : vector<8x32xf32>
    %190 = vector.broadcast %171 : vector<1x32xf32> to vector<8x32xf32>
    %191 = arith.mulf %189, %190 : vector<8x32xf32>
    %192 = vector.broadcast %173 : vector<1x32xf32> to vector<8x32xf32>
    %193 = arith.addf %191, %192 : vector<8x32xf32>
    %194 = arith.truncf %193 : vector<8x32xf32> to vector<8x32xbf16>
    %c1 = arith.constant 1 : index
    %c0_81 = arith.constant 0 : index
    %c0_82 = arith.constant 0 : index
    %195 = vector.load %arg4[%c1, %c0_81, %c0_82] : memref<2x32x96xbf16, #tpu.memory_space<vmem>>, vector<1x32x96xbf16>
    %196 = vector.shape_cast %195 : vector<1x32x96xbf16> to vector<32x96xbf16>
    %cst_83 = arith.constant dense<0.000000e+00> : vector<8x96xf32>
    %197 = tpu.matmul %194, %196, %cst_83 {dimension_numbers = #tpu.dot_dimension_numbers<[1], [0], [0], [1], [0, 0, 1, 1], [], []>} : vector<8x32xbf16>, vector<32x96xbf16>, vector<8x96xf32> -> vector<8x96xf32>
    %c1_84 = arith.constant 1 : index
    %c0_85 = arith.constant 0 : index
    %c0_86 = arith.constant 0 : index
    %198 = vector.load %arg5[%c1_84, %c0_85, %c0_86] : memref<2x1x96xf32, #tpu.memory_space<vmem>>, vector<1x1x96xf32>
    %199 = vector.shape_cast %198 : vector<1x1x96xf32> to vector<1x96xf32>
    %200 = vector.broadcast %199 : vector<1x96xf32> to vector<8x96xf32>
    %201 = arith.addf %197, %200 : vector<8x96xf32>
    %c1_87 = arith.constant 1 : index
    %c0_88 = arith.constant 0 : index
    %c0_89 = arith.constant 0 : index
    %202 = vector.load %arg6[%c1_87, %c0_88, %c0_89] : memref<2x32x32xbf16, #tpu.memory_space<vmem>>, vector<1x32x32xbf16>
    %203 = vector.shape_cast %202 : vector<1x32x32xbf16> to vector<32x32xbf16>
    %204 = vector.extract_strided_slice %201 {offsets = [0, 0], sizes = [8, 32], strides = [1, 1]} : vector<8x96xf32> to vector<8x32xf32>
    %205 = vector.extract_strided_slice %201 {offsets = [0, 32], sizes = [8, 32], strides = [1, 1]} : vector<8x96xf32> to vector<8x32xf32>
    %206 = vector.extract_strided_slice %201 {offsets = [0, 64], sizes = [8, 32], strides = [1, 1]} : vector<8x96xf32> to vector<8x32xf32>
    %cst_90 = arith.constant 0.000000e+00 : f32
    %207 = vector.broadcast %cst_90 : f32 to vector<8x32xf32>
    %208 = vector.extract_strided_slice %204 {offsets = [0, 0], sizes = [8, 8], strides = [1, 1]} : vector<8x32xf32> to vector<8x8xf32>
    %cst_91 = arith.constant 0.353553385 : f32
    %209 = vector.broadcast %cst_91 : f32 to vector<8x8xf32>
    %210 = arith.mulf %208, %209 : vector<8x8xf32>
    %211 = arith.truncf %210 : vector<8x8xf32> to vector<8x8xbf16>
    %212 = vector.extract_strided_slice %205 {offsets = [0, 0], sizes = [8, 8], strides = [1, 1]} : vector<8x32xf32> to vector<8x8xf32>
    %213 = arith.truncf %212 : vector<8x8xf32> to vector<8x8xbf16>
    %214 = vector.extract_strided_slice %206 {offsets = [0, 0], sizes = [8, 8], strides = [1, 1]} : vector<8x32xf32> to vector<8x8xf32>
    %215 = arith.truncf %214 : vector<8x8xf32> to vector<8x8xbf16>
    %cst_92 = arith.constant dense<0.000000e+00> : vector<8x8xf32>
    %216 = tpu.matmul %211, %213, %cst_92 {dimension_numbers = #tpu.dot_dimension_numbers<[1], [1], [0], [0], [0, 0, 1, 0], [], []>} : vector<8x8xbf16>, vector<8x8xbf16>, vector<8x8xf32> -> vector<8x8xf32>
    %cst_93 = arith.constant dense<0xFF800000> : vector<8xf32>
    %217 = vector.multi_reduction <maximumf>, %216, %cst_93 [1] : vector<8x8xf32> to vector<8xf32>
    %218 = vector.shape_cast %217 : vector<8xf32> to vector<8x1xf32>
    %219 = vector.broadcast %218 : vector<8x1xf32> to vector<8x8xf32>
    %220 = arith.subf %216, %219 : vector<8x8xf32>
    %221 = math.exp %220 : vector<8x8xf32>
    %cst_94 = arith.constant dense<0.000000e+00> : vector<8xf32>
    %222 = vector.multi_reduction <add>, %221, %cst_94 [1] : vector<8x8xf32> to vector<8xf32>
    %223 = vector.shape_cast %222 : vector<8xf32> to vector<8x1xf32>
    %224 = tpu.reciprocal %223 {approx = true} : vector<8x1xf32> -> vector<8x1xf32>
    %225 = vector.broadcast %224 : vector<8x1xf32> to vector<8x8xf32>
    %226 = arith.mulf %221, %225 : vector<8x8xf32>
    %227 = arith.truncf %226 : vector<8x8xf32> to vector<8x8xbf16>
    %cst_95 = arith.constant dense<0.000000e+00> : vector<8x8xf32>
    %228 = tpu.matmul %227, %215, %cst_95 {dimension_numbers = #tpu.dot_dimension_numbers<[1], [0], [0], [1], [0, 0, 1, 1], [], []>} : vector<8x8xbf16>, vector<8x8xbf16>, vector<8x8xf32> -> vector<8x8xf32>
    %229 = arith.truncf %228 : vector<8x8xf32> to vector<8x8xbf16>
    %230 = vector.extract_strided_slice %203 {offsets = [0, 0], sizes = [8, 32], strides = [1, 1]} : vector<32x32xbf16> to vector<8x32xbf16>
    %cst_96 = arith.constant dense<0.000000e+00> : vector<8x32xf32>
    %231 = tpu.matmul %229, %230, %cst_96 {dimension_numbers = #tpu.dot_dimension_numbers<[1], [0], [0], [1], [0, 0, 1, 1], [], []>} : vector<8x8xbf16>, vector<8x32xbf16>, vector<8x32xf32> -> vector<8x32xf32>
    %232 = arith.addf %207, %231 : vector<8x32xf32>
    %233 = vector.extract_strided_slice %204 {offsets = [0, 8], sizes = [8, 8], strides = [1, 1]} : vector<8x32xf32> to vector<8x8xf32>
    %cst_97 = arith.constant 0.353553385 : f32
    %234 = vector.broadcast %cst_97 : f32 to vector<8x8xf32>
    %235 = arith.mulf %233, %234 : vector<8x8xf32>
    %236 = arith.truncf %235 : vector<8x8xf32> to vector<8x8xbf16>
    %237 = vector.extract_strided_slice %205 {offsets = [0, 8], sizes = [8, 8], strides = [1, 1]} : vector<8x32xf32> to vector<8x8xf32>
    %238 = arith.truncf %237 : vector<8x8xf32> to vector<8x8xbf16>
    %239 = vector.extract_strided_slice %206 {offsets = [0, 8], sizes = [8, 8], strides = [1, 1]} : vector<8x32xf32> to vector<8x8xf32>
    %240 = arith.truncf %239 : vector<8x8xf32> to vector<8x8xbf16>
    %cst_98 = arith.constant dense<0.000000e+00> : vector<8x8xf32>
    %241 = tpu.matmul %236, %238, %cst_98 {dimension_numbers = #tpu.dot_dimension_numbers<[1], [1], [0], [0], [0, 0, 1, 0], [], []>} : vector<8x8xbf16>, vector<8x8xbf16>, vector<8x8xf32> -> vector<8x8xf32>
    %cst_99 = arith.constant dense<0xFF800000> : vector<8xf32>
    %242 = vector.multi_reduction <maximumf>, %241, %cst_99 [1] : vector<8x8xf32> to vector<8xf32>
    %243 = vector.shape_cast %242 : vector<8xf32> to vector<8x1xf32>
    %244 = vector.broadcast %243 : vector<8x1xf32> to vector<8x8xf32>
    %245 = arith.subf %241, %244 : vector<8x8xf32>
    %246 = math.exp %245 : vector<8x8xf32>
    %cst_100 = arith.constant dense<0.000000e+00> : vector<8xf32>
    %247 = vector.multi_reduction <add>, %246, %cst_100 [1] : vector<8x8xf32> to vector<8xf32>
    %248 = vector.shape_cast %247 : vector<8xf32> to vector<8x1xf32>
    %249 = tpu.reciprocal %248 {approx = true} : vector<8x1xf32> -> vector<8x1xf32>
    %250 = vector.broadcast %249 : vector<8x1xf32> to vector<8x8xf32>
    %251 = arith.mulf %246, %250 : vector<8x8xf32>
    %252 = arith.truncf %251 : vector<8x8xf32> to vector<8x8xbf16>
    %cst_101 = arith.constant dense<0.000000e+00> : vector<8x8xf32>
    %253 = tpu.matmul %252, %240, %cst_101 {dimension_numbers = #tpu.dot_dimension_numbers<[1], [0], [0], [1], [0, 0, 1, 1], [], []>} : vector<8x8xbf16>, vector<8x8xbf16>, vector<8x8xf32> -> vector<8x8xf32>
    %254 = arith.truncf %253 : vector<8x8xf32> to vector<8x8xbf16>
    %255 = vector.extract_strided_slice %203 {offsets = [8, 0], sizes = [8, 32], strides = [1, 1]} : vector<32x32xbf16> to vector<8x32xbf16>
    %cst_102 = arith.constant dense<0.000000e+00> : vector<8x32xf32>
    %256 = tpu.matmul %254, %255, %cst_102 {dimension_numbers = #tpu.dot_dimension_numbers<[1], [0], [0], [1], [0, 0, 1, 1], [], []>} : vector<8x8xbf16>, vector<8x32xbf16>, vector<8x32xf32> -> vector<8x32xf32>
    %257 = arith.addf %232, %256 : vector<8x32xf32>
    %258 = vector.extract_strided_slice %204 {offsets = [0, 16], sizes = [8, 8], strides = [1, 1]} : vector<8x32xf32> to vector<8x8xf32>
    %cst_103 = arith.constant 0.353553385 : f32
    %259 = vector.broadcast %cst_103 : f32 to vector<8x8xf32>
    %260 = arith.mulf %258, %259 : vector<8x8xf32>
    %261 = arith.truncf %260 : vector<8x8xf32> to vector<8x8xbf16>
    %262 = vector.extract_strided_slice %205 {offsets = [0, 16], sizes = [8, 8], strides = [1, 1]} : vector<8x32xf32> to vector<8x8xf32>
    %263 = arith.truncf %262 : vector<8x8xf32> to vector<8x8xbf16>
    %264 = vector.extract_strided_slice %206 {offsets = [0, 16], sizes = [8, 8], strides = [1, 1]} : vector<8x32xf32> to vector<8x8xf32>
    %265 = arith.truncf %264 : vector<8x8xf32> to vector<8x8xbf16>
    %cst_104 = arith.constant dense<0.000000e+00> : vector<8x8xf32>
    %266 = tpu.matmul %261, %263, %cst_104 {dimension_numbers = #tpu.dot_dimension_numbers<[1], [1], [0], [0], [0, 0, 1, 0], [], []>} : vector<8x8xbf16>, vector<8x8xbf16>, vector<8x8xf32> -> vector<8x8xf32>
    %cst_105 = arith.constant dense<0xFF800000> : vector<8xf32>
    %267 = vector.multi_reduction <maximumf>, %266, %cst_105 [1] : vector<8x8xf32> to vector<8xf32>
    %268 = vector.shape_cast %267 : vector<8xf32> to vector<8x1xf32>
    %269 = vector.broadcast %268 : vector<8x1xf32> to vector<8x8xf32>
    %270 = arith.subf %266, %269 : vector<8x8xf32>
    %271 = math.exp %270 : vector<8x8xf32>
    %cst_106 = arith.constant dense<0.000000e+00> : vector<8xf32>
    %272 = vector.multi_reduction <add>, %271, %cst_106 [1] : vector<8x8xf32> to vector<8xf32>
    %273 = vector.shape_cast %272 : vector<8xf32> to vector<8x1xf32>
    %274 = tpu.reciprocal %273 {approx = true} : vector<8x1xf32> -> vector<8x1xf32>
    %275 = vector.broadcast %274 : vector<8x1xf32> to vector<8x8xf32>
    %276 = arith.mulf %271, %275 : vector<8x8xf32>
    %277 = arith.truncf %276 : vector<8x8xf32> to vector<8x8xbf16>
    %cst_107 = arith.constant dense<0.000000e+00> : vector<8x8xf32>
    %278 = tpu.matmul %277, %265, %cst_107 {dimension_numbers = #tpu.dot_dimension_numbers<[1], [0], [0], [1], [0, 0, 1, 1], [], []>} : vector<8x8xbf16>, vector<8x8xbf16>, vector<8x8xf32> -> vector<8x8xf32>
    %279 = arith.truncf %278 : vector<8x8xf32> to vector<8x8xbf16>
    %280 = vector.extract_strided_slice %203 {offsets = [16, 0], sizes = [8, 32], strides = [1, 1]} : vector<32x32xbf16> to vector<8x32xbf16>
    %cst_108 = arith.constant dense<0.000000e+00> : vector<8x32xf32>
    %281 = tpu.matmul %279, %280, %cst_108 {dimension_numbers = #tpu.dot_dimension_numbers<[1], [0], [0], [1], [0, 0, 1, 1], [], []>} : vector<8x8xbf16>, vector<8x32xbf16>, vector<8x32xf32> -> vector<8x32xf32>
    %282 = arith.addf %257, %281 : vector<8x32xf32>
    %283 = vector.extract_strided_slice %204 {offsets = [0, 24], sizes = [8, 8], strides = [1, 1]} : vector<8x32xf32> to vector<8x8xf32>
    %cst_109 = arith.constant 0.353553385 : f32
    %284 = vector.broadcast %cst_109 : f32 to vector<8x8xf32>
    %285 = arith.mulf %283, %284 : vector<8x8xf32>
    %286 = arith.truncf %285 : vector<8x8xf32> to vector<8x8xbf16>
    %287 = vector.extract_strided_slice %205 {offsets = [0, 24], sizes = [8, 8], strides = [1, 1]} : vector<8x32xf32> to vector<8x8xf32>
    %288 = arith.truncf %287 : vector<8x8xf32> to vector<8x8xbf16>
    %289 = vector.extract_strided_slice %206 {offsets = [0, 24], sizes = [8, 8], strides = [1, 1]} : vector<8x32xf32> to vector<8x8xf32>
    %290 = arith.truncf %289 : vector<8x8xf32> to vector<8x8xbf16>
    %cst_110 = arith.constant dense<0.000000e+00> : vector<8x8xf32>
    %291 = tpu.matmul %286, %288, %cst_110 {dimension_numbers = #tpu.dot_dimension_numbers<[1], [1], [0], [0], [0, 0, 1, 0], [], []>} : vector<8x8xbf16>, vector<8x8xbf16>, vector<8x8xf32> -> vector<8x8xf32>
    %cst_111 = arith.constant dense<0xFF800000> : vector<8xf32>
    %292 = vector.multi_reduction <maximumf>, %291, %cst_111 [1] : vector<8x8xf32> to vector<8xf32>
    %293 = vector.shape_cast %292 : vector<8xf32> to vector<8x1xf32>
    %294 = vector.broadcast %293 : vector<8x1xf32> to vector<8x8xf32>
    %295 = arith.subf %291, %294 : vector<8x8xf32>
    %296 = math.exp %295 : vector<8x8xf32>
    %cst_112 = arith.constant dense<0.000000e+00> : vector<8xf32>
    %297 = vector.multi_reduction <add>, %296, %cst_112 [1] : vector<8x8xf32> to vector<8xf32>
    %298 = vector.shape_cast %297 : vector<8xf32> to vector<8x1xf32>
    %299 = tpu.reciprocal %298 {approx = true} : vector<8x1xf32> -> vector<8x1xf32>
    %300 = vector.broadcast %299 : vector<8x1xf32> to vector<8x8xf32>
    %301 = arith.mulf %296, %300 : vector<8x8xf32>
    %302 = arith.truncf %301 : vector<8x8xf32> to vector<8x8xbf16>
    %cst_113 = arith.constant dense<0.000000e+00> : vector<8x8xf32>
    %303 = tpu.matmul %302, %290, %cst_113 {dimension_numbers = #tpu.dot_dimension_numbers<[1], [0], [0], [1], [0, 0, 1, 1], [], []>} : vector<8x8xbf16>, vector<8x8xbf16>, vector<8x8xf32> -> vector<8x8xf32>
    %304 = arith.truncf %303 : vector<8x8xf32> to vector<8x8xbf16>
    %305 = vector.extract_strided_slice %203 {offsets = [24, 0], sizes = [8, 32], strides = [1, 1]} : vector<32x32xbf16> to vector<8x32xbf16>
    %cst_114 = arith.constant dense<0.000000e+00> : vector<8x32xf32>
    %306 = tpu.matmul %304, %305, %cst_114 {dimension_numbers = #tpu.dot_dimension_numbers<[1], [0], [0], [1], [0, 0, 1, 1], [], []>} : vector<8x8xbf16>, vector<8x32xbf16>, vector<8x32xf32> -> vector<8x32xf32>
    %307 = arith.addf %282, %306 : vector<8x32xf32>
    %c1_115 = arith.constant 1 : index
    %c0_116 = arith.constant 0 : index
    %c0_117 = arith.constant 0 : index
    %308 = vector.load %arg7[%c1_115, %c0_116, %c0_117] : memref<2x1x32xf32, #tpu.memory_space<vmem>>, vector<1x1x32xf32>
    %309 = vector.shape_cast %308 : vector<1x1x32xf32> to vector<1x32xf32>
    %310 = vector.broadcast %309 : vector<1x32xf32> to vector<8x32xf32>
    %311 = arith.addf %307, %310 : vector<8x32xf32>
    %312 = arith.addf %193, %311 : vector<8x32xf32>
    %c1_118 = arith.constant 1 : index
    %c0_119 = arith.constant 0 : index
    %c0_120 = arith.constant 0 : index
    %313 = vector.load %arg8[%c1_118, %c0_119, %c0_120] : memref<2x1x32xf32, #tpu.memory_space<vmem>>, vector<1x1x32xf32>
    %314 = vector.shape_cast %313 : vector<1x1x32xf32> to vector<1x32xf32>
    %c1_121 = arith.constant 1 : index
    %c0_122 = arith.constant 0 : index
    %c0_123 = arith.constant 0 : index
    %315 = vector.load %arg9[%c1_121, %c0_122, %c0_123] : memref<2x1x32xf32, #tpu.memory_space<vmem>>, vector<1x1x32xf32>
    %316 = vector.shape_cast %315 : vector<1x1x32xf32> to vector<1x32xf32>
    %cst_124 = arith.constant dense<0.000000e+00> : vector<8xf32>
    %317 = vector.multi_reduction <add>, %312, %cst_124 [1] : vector<8x32xf32> to vector<8xf32>
    %318 = vector.shape_cast %317 : vector<8xf32> to vector<8x1xf32>
    %cst_125 = arith.constant 3.200000e+01 : f32
    %319 = vector.broadcast %cst_125 : f32 to vector<8x1xf32>
    %320 = arith.divf %318, %319 : vector<8x1xf32>
    %321 = vector.broadcast %320 : vector<8x1xf32> to vector<8x32xf32>
    %322 = arith.subf %312, %321 : vector<8x32xf32>
    %323 = arith.mulf %322, %322 : vector<8x32xf32>
    %cst_126 = arith.constant dense<0.000000e+00> : vector<8xf32>
    %324 = vector.multi_reduction <add>, %323, %cst_126 [1] : vector<8x32xf32> to vector<8xf32>
    %325 = vector.shape_cast %324 : vector<8xf32> to vector<8x1xf32>
    %cst_127 = arith.constant 3.200000e+01 : f32
    %326 = vector.broadcast %cst_127 : f32 to vector<8x1xf32>
    %327 = arith.divf %325, %326 : vector<8x1xf32>
    %cst_128 = arith.constant 9.99999974E-6 : f32
    %328 = vector.broadcast %cst_128 : f32 to vector<8x1xf32>
    %329 = arith.addf %327, %328 : vector<8x1xf32>
    %330 = math.rsqrt %329 : vector<8x1xf32>
    %331 = vector.broadcast %330 : vector<8x1xf32> to vector<8x32xf32>
    %332 = arith.mulf %322, %331 : vector<8x32xf32>
    %333 = vector.broadcast %314 : vector<1x32xf32> to vector<8x32xf32>
    %334 = arith.mulf %332, %333 : vector<8x32xf32>
    %335 = vector.broadcast %316 : vector<1x32xf32> to vector<8x32xf32>
    %336 = arith.addf %334, %335 : vector<8x32xf32>
    %337 = arith.truncf %336 : vector<8x32xf32> to vector<8x32xbf16>
    %c1_129 = arith.constant 1 : index
    %c0_130 = arith.constant 0 : index
    %c0_131 = arith.constant 0 : index
    %338 = vector.load %arg10[%c1_129, %c0_130, %c0_131] : memref<2x32x64xbf16, #tpu.memory_space<vmem>>, vector<1x32x64xbf16>
    %339 = vector.shape_cast %338 : vector<1x32x64xbf16> to vector<32x64xbf16>
    %cst_132 = arith.constant dense<0.000000e+00> : vector<8x64xf32>
    %340 = tpu.matmul %337, %339, %cst_132 {dimension_numbers = #tpu.dot_dimension_numbers<[1], [0], [0], [1], [0, 0, 1, 1], [], []>} : vector<8x32xbf16>, vector<32x64xbf16>, vector<8x64xf32> -> vector<8x64xf32>
    %c1_133 = arith.constant 1 : index
    %c0_134 = arith.constant 0 : index
    %c0_135 = arith.constant 0 : index
    %341 = vector.load %arg11[%c1_133, %c0_134, %c0_135] : memref<2x1x64xf32, #tpu.memory_space<vmem>>, vector<1x1x64xf32>
    %342 = vector.shape_cast %341 : vector<1x1x64xf32> to vector<1x64xf32>
    %343 = vector.broadcast %342 : vector<1x64xf32> to vector<8x64xf32>
    %344 = arith.addf %340, %343 : vector<8x64xf32>
    %cst_136 = arith.constant 0.000000e+00 : f32
    %345 = vector.broadcast %cst_136 : f32 to vector<8x64xf32>
    %346 = arith.maximumf %344, %345 : vector<8x64xf32>
    %347 = arith.truncf %346 : vector<8x64xf32> to vector<8x64xbf16>
    %c1_137 = arith.constant 1 : index
    %c0_138 = arith.constant 0 : index
    %c0_139 = arith.constant 0 : index
    %348 = vector.load %arg12[%c1_137, %c0_138, %c0_139] : memref<2x64x32xbf16, #tpu.memory_space<vmem>>, vector<1x64x32xbf16>
    %349 = vector.shape_cast %348 : vector<1x64x32xbf16> to vector<64x32xbf16>
    %cst_140 = arith.constant dense<0.000000e+00> : vector<8x32xf32>
    %350 = tpu.matmul %347, %349, %cst_140 {dimension_numbers = #tpu.dot_dimension_numbers<[1], [0], [0], [1], [0, 0, 1, 1], [], []>} : vector<8x64xbf16>, vector<64x32xbf16>, vector<8x32xf32> -> vector<8x32xf32>
    %c1_141 = arith.constant 1 : index
    %c0_142 = arith.constant 0 : index
    %c0_143 = arith.constant 0 : index
    %351 = vector.load %arg13[%c1_141, %c0_142, %c0_143] : memref<2x1x32xf32, #tpu.memory_space<vmem>>, vector<1x1x32xf32>
    %352 = vector.shape_cast %351 : vector<1x1x32xf32> to vector<1x32xf32>
    %353 = vector.broadcast %352 : vector<1x32xf32> to vector<8x32xf32>
    %354 = arith.addf %350, %353 : vector<8x32xf32>
    %355 = arith.addf %336, %354 : vector<8x32xf32>
    %c1_144 = arith.constant 1 : index
    %c0_145 = arith.constant 0 : index
    %c0_146 = arith.constant 0 : index
    %356 = vector.load %arg14[%c1_144, %c0_145, %c0_146] : memref<2x1x32xf32, #tpu.memory_space<vmem>>, vector<1x1x32xf32>
    %357 = vector.shape_cast %356 : vector<1x1x32xf32> to vector<1x32xf32>
    %c1_147 = arith.constant 1 : index
    %c0_148 = arith.constant 0 : index
    %c0_149 = arith.constant 0 : index
    %358 = vector.load %arg15[%c1_147, %c0_148, %c0_149] : memref<2x1x32xf32, #tpu.memory_space<vmem>>, vector<1x1x32xf32>
    %359 = vector.shape_cast %358 : vector<1x1x32xf32> to vector<1x32xf32>
    %cst_150 = arith.constant dense<0.000000e+00> : vector<8xf32>
    %360 = vector.multi_reduction <add>, %355, %cst_150 [1] : vector<8x32xf32> to vector<8xf32>
    %361 = vector.shape_cast %360 : vector<8xf32> to vector<8x1xf32>
    %cst_151 = arith.constant 3.200000e+01 : f32
    %362 = vector.broadcast %cst_151 : f32 to vector<8x1xf32>
    %363 = arith.divf %361, %362 : vector<8x1xf32>
    %364 = vector.broadcast %363 : vector<8x1xf32> to vector<8x32xf32>
    %365 = arith.subf %355, %364 : vector<8x32xf32>
    %366 = arith.mulf %365, %365 : vector<8x32xf32>
    %cst_152 = arith.constant dense<0.000000e+00> : vector<8xf32>
    %367 = vector.multi_reduction <add>, %366, %cst_152 [1] : vector<8x32xf32> to vector<8xf32>
    %368 = vector.shape_cast %367 : vector<8xf32> to vector<8x1xf32>
    %cst_153 = arith.constant 3.200000e+01 : f32
    %369 = vector.broadcast %cst_153 : f32 to vector<8x1xf32>
    %370 = arith.divf %368, %369 : vector<8x1xf32>
    %cst_154 = arith.constant 9.99999974E-6 : f32
    %371 = vector.broadcast %cst_154 : f32 to vector<8x1xf32>
    %372 = arith.addf %370, %371 : vector<8x1xf32>
    %373 = math.rsqrt %372 : vector<8x1xf32>
    %374 = vector.broadcast %373 : vector<8x1xf32> to vector<8x32xf32>
    %375 = arith.mulf %365, %374 : vector<8x32xf32>
    %376 = vector.broadcast %357 : vector<1x32xf32> to vector<8x32xf32>
    %377 = arith.mulf %375, %376 : vector<8x32xf32>
    %378 = vector.broadcast %359 : vector<1x32xf32> to vector<8x32xf32>
    %379 = arith.addf %377, %378 : vector<8x32xf32>
    %380 = arith.truncf %379 : vector<8x32xf32> to vector<8x32xbf16>
    %c0_155 = arith.constant 0 : index
    %c0_156 = arith.constant 0 : index
    %381 = vector.load %arg16[%c0_155, %c0_156] : memref<32x8xbf16, #tpu.memory_space<vmem>>, vector<32x8xbf16>
    %cst_157 = arith.constant dense<0.000000e+00> : vector<8x8xf32>
    %382 = tpu.matmul %380, %381, %cst_157 {dimension_numbers = #tpu.dot_dimension_numbers<[1], [0], [0], [1], [0, 0, 1, 1], [], []>} : vector<8x32xbf16>, vector<32x8xbf16>, vector<8x8xf32> -> vector<8x8xf32>
    %c0_158 = arith.constant 0 : index
    %c0_159 = arith.constant 0 : index
    %383 = vector.load %arg17[%c0_158, %c0_159] : memref<1x8xf32, #tpu.memory_space<vmem>>, vector<1x8xf32>
    %384 = vector.broadcast %383 : vector<1x8xf32> to vector<8x8xf32>
    %385 = arith.addf %382, %384 : vector<8x8xf32>
    %386 = vector.shape_cast %385 : vector<8x8xf32> to vector<1x8x8xf32>
    %c0_160 = arith.constant 0 : index
    %c0_161 = arith.constant 0 : index
    %c0_162 = arith.constant 0 : index
    %387 = vector.load %arg18[%c0_160, %c0_161, %c0_162] : memref<1x8x8xf32, #tpu.memory_space<vmem>>, vector<1x8x8xf32>
    tpu.vector_store %arg18[%c0_160, %c0_161, %c0_162], %386 {strides = array<i32>} : memref<1x8x8xf32, #tpu.memory_space<vmem>>, vector<1x8x8xf32>,
    return
  }
  func.func @transform_0(%arg0: i32) -> (i32, i32, i32) {
    %c0_i32 = arith.constant 0 : i32
    %c0_i32_0 = arith.constant 0 : i32
    %c0_i32_1 = arith.constant 0 : i32
    return %arg0, %c0_i32, %c0_i32_0 : i32, i32, i32
  }
  func.func @transform_1(%arg0: i32) -> (i32, i32) {
    %c0_i32 = arith.constant 0 : i32
    %c0_i32_0 = arith.constant 0 : i32
    %c0_i32_1 = arith.constant 0 : i32
    return %c0_i32, %c0_i32_0 : i32, i32
  }
  func.func @transform_2(%arg0: i32) -> (i32, i32) {
    %c0_i32 = arith.constant 0 : i32
    %c0_i32_0 = arith.constant 0 : i32
    %c0_i32_1 = arith.constant 0 : i32
    return %c0_i32, %c0_i32_0 : i32, i32
  }
  func.func @transform_3(%arg0: i32) -> (i32, i32, i32) {
    %c0_i32 = arith.constant 0 : i32
    %c0_i32_0 = arith.constant 0 : i32
    %c0_i32_1 = arith.constant 0 : i32
    %c0_i32_2 = arith.constant 0 : i32
    return %c0_i32, %c0_i32_0, %c0_i32_1 : i32, i32, i32
  }
  func.func @transform_4(%arg0: i32) -> (i32, i32, i32) {
    %c0_i32 = arith.constant 0 : i32
    %c0_i32_0 = arith.constant 0 : i32
    %c0_i32_1 = arith.constant 0 : i32
    %c0_i32_2 = arith.constant 0 : i32
    return %c0_i32, %c0_i32_0, %c0_i32_1 : i32, i32, i32
  }
  func.func @transform_5(%arg0: i32) -> (i32, i32, i32) {
    %c0_i32 = arith.constant 0 : i32
    %c0_i32_0 = arith.constant 0 : i32
    %c0_i32_1 = arith.constant 0 : i32
    %c0_i32_2 = arith.constant 0 : i32
    return %c0_i32, %c0_i32_0, %c0_i32_1 : i32, i32, i32
  }
  func.func @transform_6(%arg0: i32) -> (i32, i32, i32) {
    %c0_i32 = arith.constant 0 : i32
    %c0_i32_0 = arith.constant 0 : i32
    %c0_i32_1 = arith.constant 0 : i32
    %c0_i32_2 = arith.constant 0 : i32
    return %c0_i32, %c0_i32_0, %c0_i32_1 : i32, i32, i32
  }
  func.func @transform_7(%arg0: i32) -> (i32, i32, i32) {
    %c0_i32 = arith.constant 0 : i32
    %c0_i32_0 = arith.constant 0 : i32
    %c0_i32_1 = arith.constant 0 : i32
    %c0_i32_2 = arith.constant 0 : i32
    return %c0_i32, %c0_i32_0, %c0_i32_1 : i32, i32, i32
  }
  func.func @transform_8(%arg0: i32) -> (i32, i32, i32) {
    %c0_i32 = arith.constant 0 : i32
    %c0_i32_0 = arith.constant 0 : i32
    %c0_i32_1 = arith.constant 0 : i32
    %c0_i32_2 = arith.constant 0 : i32
    return %c0_i32, %c0_i32_0, %c0_i32_1 : i32, i32, i32
  }
  func.func @transform_9(%arg0: i32) -> (i32, i32, i32) {
    %c0_i32 = arith.constant 0 : i32
    %c0_i32_0 = arith.constant 0 : i32
    %c0_i32_1 = arith.constant 0 : i32
    %c0_i32_2 = arith.constant 0 : i32
    return %c0_i32, %c0_i32_0, %c0_i32_1 : i32, i32, i32
  }
  func.func @transform_10(%arg0: i32) -> (i32, i32, i32) {
    %c0_i32 = arith.constant 0 : i32
    %c0_i32_0 = arith.constant 0 : i32
    %c0_i32_1 = arith.constant 0 : i32
    %c0_i32_2 = arith.constant 0 : i32
    return %c0_i32, %c0_i32_0, %c0_i32_1 : i32, i32, i32
  }
  func.func @transform_11(%arg0: i32) -> (i32, i32, i32) {
    %c0_i32 = arith.constant 0 : i32
    %c0_i32_0 = arith.constant 0 : i32
    %c0_i32_1 = arith.constant 0 : i32
    %c0_i32_2 = arith.constant 0 : i32
    return %c0_i32, %c0_i32_0, %c0_i32_1 : i32, i32, i32
  }
  func.func @transform_12(%arg0: i32) -> (i32, i32, i32) {
    %c0_i32 = arith.constant 0 : i32
    %c0_i32_0 = arith.constant 0 : i32
    %c0_i32_1 = arith.constant 0 : i32
    %c0_i32_2 = arith.constant 0 : i32
    return %c0_i32, %c0_i32_0, %c0_i32_1 : i32, i32, i32
  }
  func.func @transform_13(%arg0: i32) -> (i32, i32, i32) {
    %c0_i32 = arith.constant 0 : i32
    %c0_i32_0 = arith.constant 0 : i32
    %c0_i32_1 = arith.constant 0 : i32
    %c0_i32_2 = arith.constant 0 : i32
    return %c0_i32, %c0_i32_0, %c0_i32_1 : i32, i32, i32
  }
  func.func @transform_14(%arg0: i32) -> (i32, i32, i32) {
    %c0_i32 = arith.constant 0 : i32
    %c0_i32_0 = arith.constant 0 : i32
    %c0_i32_1 = arith.constant 0 : i32
    %c0_i32_2 = arith.constant 0 : i32
    return %c0_i32, %c0_i32_0, %c0_i32_1 : i32, i32, i32
  }
  func.func @transform_15(%arg0: i32) -> (i32, i32) {
    %c0_i32 = arith.constant 0 : i32
    %c0_i32_0 = arith.constant 0 : i32
    %c0_i32_1 = arith.constant 0 : i32
    return %c0_i32, %c0_i32_0 : i32, i32
  }
  func.func @transform_16(%arg0: i32) -> (i32, i32) {
    %c0_i32 = arith.constant 0 : i32
    %c0_i32_0 = arith.constant 0 : i32
    %c0_i32_1 = arith.constant 0 : i32
    return %c0_i32, %c0_i32_0 : i32, i32
  }
  func.func @transform_17(%arg0: i32) -> (i32, i32, i32) {
    %c0_i32 = arith.constant 0 : i32
    %c0_i32_0 = arith.constant 0 : i32
    %c0_i32_1 = arith.constant 0 : i32
    return %arg0, %c0_i32, %c0_i32_0 : i32, i32, i32
  }
}

</mosaic_0001>

<llo_original>
// kernel: transformer_rationale_predictor.1
$region0: #{transformer_rationale_predictor.1}
  #allocation0 [shape = 'u32[]', space=smem, size = 0x4, offset = 0x4, fixed_abs, tag = 'smem constant byte address 0x4 - core index']
  #allocation1 [shape = 'u32[72,128]{1,0:T(1,128)}', space=vmem, size = 0x9000, scoped, tag = 'internal scratch']
  %s0 = inlined_call_operand.vmem [shape: f32[2,8,8], index: 0, kind: input, shape index: {}]
  %s1 = inlined_call_operand.vmem [shape: bf16[8,32], index: 1, kind: input, shape index: {}]
  %s2 = inlined_call_operand.vmem [shape: f32[1,32], index: 2, kind: input, shape index: {}]
  %s3 = inlined_call_operand.vmem [shape: bf16[2,32,96], index: 3, kind: input, shape index: {}]
  %s4 = inlined_call_operand.vmem [shape: f32[2,1,96], index: 4, kind: input, shape index: {}]
  %s5 = inlined_call_operand.vmem [shape: bf16[2,32,32], index: 5, kind: input, shape index: {}]
  %s6 = inlined_call_operand.vmem [shape: f32[2,1,32], index: 6, kind: input, shape index: {}]
  %s7 = inlined_call_operand.vmem [shape: f32[2,1,32], index: 7, kind: input, shape index: {}]
  %s8 = inlined_call_operand.hbm [shape: f32[2,1,32], index: 8, kind: input, shape index: {}]
  %s9 = inlined_call_operand.vmem [shape: bf16[2,32,64], index: 9, kind: input, shape index: {}]
  %s10 = inlined_call_operand.hbm [shape: f32[2,1,64], index: 10, kind: input, shape index: {}]
  %s11 = inlined_call_operand.vmem [shape: bf16[2,64,32], index: 11, kind: input, shape index: {}]
  %s12 = inlined_call_operand.hbm [shape: f32[2,1,32], index: 12, kind: input, shape index: {}]
  %s13 = inlined_call_operand.vmem [shape: f32[2,1,32], index: 13, kind: input, shape index: {}]
  %s14 = inlined_call_operand.hbm [shape: f32[2,1,32], index: 14, kind: input, shape index: {}]
  %s15 = inlined_call_operand.vmem [shape: bf16[32,8], index: 15, kind: input, shape index: {}]
  %s16 = inlined_call_operand.hbm [shape: f32[1,8], index: 16, kind: input, shape index: {}]
  %s17 = inlined_call_operand.hbm [shape: f32[2,8,8], index: 17, kind: output, shape index: {}]
  %s18 = sld [smem:[#allocation0]]
  $region121: #{transformer_rationale_predictor.1} parent=0
    _
  %s20 = ssub.s32 1, %s18
  %s21 = scalar_select 0, %s20, %s18
  $region1: #{transformer_rationale_predictor.1} parent=0
    #allocation2 [shape = 'u8[1024]{0}', space=vmem, size = 0x400, scoped, tag = 'input window, operand 8, single buffered']
    #allocation3 [shape = 's32[2]{0}', space=sflag, size = 0x8, scoped, tag = 'scoped memory for transformer_rationale_predictor.1']
    #allocation4 [shape = 's32[2]{0}', space=sflag, size = 0x8, scoped, tag = 'scoped memory for transformer_rationale_predictor.1']
    #allocation5 [shape = 'u8[1024]{0}', space=vmem, size = 0x400, scoped, tag = 'input window, operand 10, single buffered']
    #allocation6 [shape = 's32[1]{0}', space=sflag, size = 0x4, scoped, tag = 'scoped memory for transformer_rationale_predictor.1']
    #allocation7 [shape = 'u8[1024]{0}', space=vmem, size = 0x400, scoped, tag = 'input window, operand 12, single buffered']
    #allocation8 [shape = 'u8[1024]{0}', space=vmem, size = 0x400, scoped, tag = 'input window, operand 14, single buffered']
    #allocation9 [shape = 's32[1]{0}', space=sflag, size = 0x4, scoped, tag = 'scoped memory for transformer_rationale_predictor.1']
    #allocation10 [shape = 'u8[512]{0}', space=vmem, size = 0x400, scoped, tag = 'input window, operand 16, single buffered']
    #allocation11 [shape = 'u8[8192]{0}', space=vmem, size = 0x2000, scoped, tag = 'output window, operand 0']
    %22 = vsyncpa [#allocation3], 0
    %23 = vsyncpa [#allocation6], 0
    %24 = vsyncpa [#allocation9], 0
    %25 = vsyncpa [#allocation4], 0
    %s26 = scalar_lea.sflag [#allocation4], 1
    %27 = vsyncpa %s26, 0
    loop: start=0, step=1, limit=4
    $region2: #{transformer_rationale_predictor.1} parent=1 // loop_pre_header
      _
    $region3: #{transformer_rationale_predictor.1} parent=1 // loop_header
      %s29 = sphi 0, %s33
      %p30 = scmp.ge.s32.totalorder %s29, 4
      %s39 = sphi 0, %s41
      %s42 = sphi 0, %s39
      %s43 = sphi 0, %s42
      %s59 = sphi 0, %s43
      %s63 = sphi 0, %s63
      %s65 = sphi 0, %s63
      %s66 = sphi 0, %s65
      %s80 = sphi 0, %s66
      %s84 = sphi 0, %s84
      %s86 = sphi 0, %s84
      %s87 = sphi 0, %s86
      %s101 = sphi 0, %s87
      %s105 = sphi 0, %s105
      %s107 = sphi 0, %s105
      %s108 = sphi 0, %s107
      %s122 = sphi 0, %s108
      %s126 = sphi 0, %s126
      %s128 = sphi 0, %s126
      %s129 = sphi 0, %s128
      %s143 = sphi 0, %s129
      %s147 = sphi 0, %s147
      %s149 = sphi 0, %s147
      %s150 = sphi 0, %s149
      %s164 = sphi 0, %s150
      %s168 = sphi 0, %s168
      %s170 = sphi 0, %s168
      %s171 = sphi 0, %s170
      %s185 = sphi 0, %s171
      %s189 = sphi 0, %s189
      %s191 = sphi 0, %s189
      %s192 = sphi 0, %s191
      %s206 = sphi 0, %s192
      %s210 = sphi 0, %s210
      %s212 = sphi 0, %s210
      %s213 = sphi 0, %s212
      %s227 = sphi 0, %s213
      %s231 = sphi 0, %s231
      %s233 = sphi 0, %s231
      %s234 = sphi 0, %s233
      %s248 = sphi 0, %s234
      %s252 = sphi 0, %s252
      %s254 = sphi 0, %s252
      %s255 = sphi 0, %s254
      %s269 = sphi 0, %s255
      %s273 = sphi 0, %s273
      %s275 = sphi 0, %s273
      %s276 = sphi 0, %s275
      %s290 = sphi 0, %s276
      %s294 = sphi 0, %s294
      %s296 = sphi 0, %s294
      %s297 = sphi 0, %s296
      %s311 = sphi 0, %s297
      %s315 = sphi 0, %s315
      %s317 = sphi 0, %s315
      %s318 = sphi 0, %s317
      %s332 = sphi 0, %s318
      %s336 = sphi 0, %s336
      %s338 = sphi 0, %s336
      %s339 = sphi 0, %s338
      %s353 = sphi 0, %s339
      %s357 = sphi 0, %s357
      %s359 = sphi 0, %s357
      %s360 = sphi 0, %s359
      %s374 = sphi 0, %s360
      %s378 = sphi 0, %s378
      %s380 = sphi 0, %s378
      %s381 = sphi 0, %s380
      %s395 = sphi 0, %s381
      %s401 = sphi 0, %s403
      %s404 = sphi 0, %s401
      %s405 = sphi 0, %s404
      %s421 = sphi 0, %s405
    $region4: #{transformer_rationale_predictor.1} parent=1 // loop_header_branch
      %32 = sbr.rel (%p30) target = $region8
    $region5: #{transformer_rationale_predictor.1} parent=1 // loop_body
      %s34 = ssub.s32 %s29, 1
      %s35 = ssub.s32 %s29, 2
      %s36 = sadd.s32 %s29, 1
      %s37 = ssub.s32 %s29, %s36
      %p38 = scmp.eq.s32.totalorder %s37, 0
      %s40 = sadd.s32 %s39, 1
      %s41 = scalar_select %p38, %s39, %s40
      %p44 = pneg %p38
      %p45 = scmp.eq.s32.totalorder %s29, 1
      %p46 = por %p44, %p45
      %p47 = scmp.ne.s32.totalorder %s39, %s42
      %p48 = scmp.eq.s32.totalorder %s29, 0
      %p49 = por %p47, %p48
      %p50 = scmp.ne.s32.totalorder %s39, %s42
      %p51 = scmp.eq.s32.totalorder %s34, 1
      %p52 = por %p50, %p51
      %p53 = scmp.ne.s32.totalorder %s42, %s43
      %p54 = scmp.eq.s32.totalorder %s34, 0
      %p55 = por %p53, %p54
      %p56 = scmp.ne.s32.totalorder %s42, %s43
      %p57 = scmp.eq.s32.totalorder %s35, 1
      %p58 = por %p56, %p57
      %p60 = scmp.ne.s32.totalorder %s43, %s59
      %p61 = scmp.eq.s32.totalorder %s35, 0
      %p62 = por %p60, %p61
      %s64 = sadd.s32 %s63, 1
      %p67 = scmp.eq.s32.totalorder %s29, 1
      %p68 = scmp.ne.s32.totalorder %s63, %s65
      %p69 = scmp.eq.s32.totalorder %s29, 0
      %p70 = por %p68, %p69
      %p71 = scmp.ne.s32.totalorder %s63, %s65
      %p72 = scmp.eq.s32.totalorder %s34, 1
      %p73 = por %p71, %p72
      %p74 = scmp.ne.s32.totalorder %s65, %s66
      %p75 = scmp.eq.s32.totalorder %s34, 0
      %p76 = por %p74, %p75
      %p77 = scmp.ne.s32.totalorder %s65, %s66
      %p78 = scmp.eq.s32.totalorder %s35, 1
      %p79 = por %p77, %p78
      %p81 = scmp.ne.s32.totalorder %s66, %s80
      %p82 = scmp.eq.s32.totalorder %s35, 0
      %p83 = por %p81, %p82
      %s85 = sadd.s32 %s84, 1
      %p88 = scmp.eq.s32.totalorder %s29, 1
      %p89 = scmp.ne.s32.totalorder %s84, %s86
      %p90 = scmp.eq.s32.totalorder %s29, 0
      %p91 = por %p89, %p90
      %p92 = scmp.ne.s32.totalorder %s84, %s86
      %p93 = scmp.eq.s32.totalorder %s34, 1
      %p94 = por %p92, %p93
      %p95 = scmp.ne.s32.totalorder %s86, %s87
      %p96 = scmp.eq.s32.totalorder %s34, 0
      %p97 = por %p95, %p96
      %p98 = scmp.ne.s32.totalorder %s86, %s87
      %p99 = scmp.eq.s32.totalorder %s35, 1
      %p100 = por %p98, %p99
      %p102 = scmp.ne.s32.totalorder %s87, %s101
      %p103 = scmp.eq.s32.totalorder %s35, 0
      %p104 = por %p102, %p103
      %s106 = sadd.s32 %s105, 1
      %p109 = scmp.eq.s32.totalorder %s29, 1
      %p110 = scmp.ne.s32.totalorder %s105, %s107
      %p111 = scmp.eq.s32.totalorder %s29, 0
      %p112 = por %p110, %p111
      %p113 = scmp.ne.s32.totalorder %s105, %s107
      %p114 = scmp.eq.s32.totalorder %s34, 1
      %p115 = por %p113, %p114
      %p116 = scmp.ne.s32.totalorder %s107, %s108
      %p117 = scmp.eq.s32.totalorder %s34, 0
      %p118 = por %p116, %p117
      %p119 = scmp.ne.s32.totalorder %s107, %s108
      %p120 = scmp.eq.s32.totalorder %s35, 1
      %p121 = por %p119, %p120
      %p123 = scmp.ne.s32.totalorder %s108, %s122
      %p124 = scmp.eq.s32.totalorder %s35, 0
      %p125 = por %p123, %p124
      %s127 = sadd.s32 %s126, 1
      %p130 = scmp.eq.s32.totalorder %s29, 1
      %p131 = scmp.ne.s32.totalorder %s126, %s128
      %p132 = scmp.eq.s32.totalorder %s29, 0
      %p133 = por %p131, %p132
      %p134 = scmp.ne.s32.totalorder %s126, %s128
      %p135 = scmp.eq.s32.totalorder %s34, 1
      %p136 = por %p134, %p135
      %p137 = scmp.ne.s32.totalorder %s128, %s129
      %p138 = scmp.eq.s32.totalorder %s34, 0
      %p139 = por %p137, %p138
      %p140 = scmp.ne.s32.totalorder %s128, %s129
      %p141 = scmp.eq.s32.totalorder %s35, 1
      %p142 = por %p140, %p141
      %p144 = scmp.ne.s32.totalorder %s129, %s143
      %p145 = scmp.eq.s32.totalorder %s35, 0
      %p146 = por %p144, %p145
      %s148 = sadd.s32 %s147, 1
      %p151 = scmp.eq.s32.totalorder %s29, 1
      %p152 = scmp.ne.s32.totalorder %s147, %s149
      %p153 = scmp.eq.s32.totalorder %s29, 0
      %p154 = por %p152, %p153
      %p155 = scmp.ne.s32.totalorder %s147, %s149
      %p156 = scmp.eq.s32.totalorder %s34, 1
      %p157 = por %p155, %p156
      %p158 = scmp.ne.s32.totalorder %s149, %s150
      %p159 = scmp.eq.s32.totalorder %s34, 0
      %p160 = por %p158, %p159
      %p161 = scmp.ne.s32.totalorder %s149, %s150
      %p162 = scmp.eq.s32.totalorder %s35, 1
      %p163 = por %p161, %p162
      %p165 = scmp.ne.s32.totalorder %s150, %s164
      %p166 = scmp.eq.s32.totalorder %s35, 0
      %p167 = por %p165, %p166
      %s169 = sadd.s32 %s168, 1
      %p172 = scmp.eq.s32.totalorder %s29, 1
      %p173 = scmp.ne.s32.totalorder %s168, %s170
      %p174 = scmp.eq.s32.totalorder %s29, 0
      %p175 = por %p173, %p174
      %p176 = scmp.ne.s32.totalorder %s168, %s170
      %p177 = scmp.eq.s32.totalorder %s34, 1
      %p178 = por %p176, %p177
      %p179 = scmp.ne.s32.totalorder %s170, %s171
      %p180 = scmp.eq.s32.totalorder %s34, 0
      %p181 = por %p179, %p180
      %p182 = scmp.ne.s32.totalorder %s170, %s171
      %p183 = scmp.eq.s32.totalorder %s35, 1
      %p184 = por %p182, %p183
      %p186 = scmp.ne.s32.totalorder %s171, %s185
      %p187 = scmp.eq.s32.totalorder %s35, 0
      %p188 = por %p186, %p187
      %s190 = sadd.s32 %s189, 1
      %p193 = scmp.eq.s32.totalorder %s29, 1
      %p194 = scmp.ne.s32.totalorder %s189, %s191
      %p195 = scmp.eq.s32.totalorder %s29, 0
      %p196 = por %p194, %p195
      %p197 = scmp.ne.s32.totalorder %s189, %s191
      %p198 = scmp.eq.s32.totalorder %s34, 1
      %p199 = por %p197, %p198
      %p200 = scmp.ne.s32.totalorder %s191, %s192
      %p201 = scmp.eq.s32.totalorder %s34, 0
      %p202 = por %p200, %p201
      %p203 = scmp.ne.s32.totalorder %s191, %s192
      %p204 = scmp.eq.s32.totalorder %s35, 1
      %p205 = por %p203, %p204
      %p207 = scmp.ne.s32.totalorder %s192, %s206
      %p208 = scmp.eq.s32.totalorder %s35, 0
      %p209 = por %p207, %p208
      %s211 = sadd.s32 %s210, 1
      %p214 = scmp.eq.s32.totalorder %s29, 1
      %p215 = scmp.ne.s32.totalorder %s210, %s212
      %p216 = scmp.eq.s32.totalorder %s29, 0
      %p217 = por %p215, %p216
      %p218 = scmp.ne.s32.totalorder %s210, %s212
      %p219 = scmp.eq.s32.totalorder %s34, 1
      %p220 = por %p218, %p219
      %p221 = scmp.ne.s32.totalorder %s212, %s213
      %p222 = scmp.eq.s32.totalorder %s34, 0
      %p223 = por %p221, %p222
      %p224 = scmp.ne.s32.totalorder %s212, %s213
      %p225 = scmp.eq.s32.totalorder %s35, 1
      %p226 = por %p224, %p225
      %p228 = scmp.ne.s32.totalorder %s213, %s227
      %p229 = scmp.eq.s32.totalorder %s35, 0
      %p230 = por %p228, %p229
      %s232 = sadd.s32 %s231, 1
      %p235 = scmp.eq.s32.totalorder %s29, 1
      %p236 = scmp.ne.s32.totalorder %s231, %s233
      %p237 = scmp.eq.s32.totalorder %s29, 0
      %p238 = por %p236, %p237
      %p239 = scmp.ne.s32.totalorder %s231, %s233
      %p240 = scmp.eq.s32.totalorder %s34, 1
      %p241 = por %p239, %p240
      %p242 = scmp.ne.s32.totalorder %s233, %s234
      %p243 = scmp.eq.s32.totalorder %s34, 0
      %p244 = por %p242, %p243
      %p245 = scmp.ne.s32.totalorder %s233, %s234
      %p246 = scmp.eq.s32.totalorder %s35, 1
      %p247 = por %p245, %p246
      %p249 = scmp.ne.s32.totalorder %s234, %s248
      %p250 = scmp.eq.s32.totalorder %s35, 0
      %p251 = por %p249, %p250
      %s253 = sadd.s32 %s252, 1
      %p256 = scmp.eq.s32.totalorder %s29, 1
      %p257 = scmp.ne.s32.totalorder %s252, %s254
      %p258 = scmp.eq.s32.totalorder %s29, 0
      %p259 = por %p257, %p258
      %p260 = scmp.ne.s32.totalorder %s252, %s254
      %p261 = scmp.eq.s32.totalorder %s34, 1
      %p262 = por %p260, %p261
      %p263 = scmp.ne.s32.totalorder %s254, %s255
      %p264 = scmp.eq.s32.totalorder %s34, 0
      %p265 = por %p263, %p264
      %p266 = scmp.ne.s32.totalorder %s254, %s255
      %p267 = scmp.eq.s32.totalorder %s35, 1
      %p268 = por %p266, %p267
      %p270 = scmp.ne.s32.totalorder %s255, %s269
      %p271 = scmp.eq.s32.totalorder %s35, 0
      %p272 = por %p270, %p271
      %s274 = sadd.s32 %s273, 1
      %p277 = scmp.eq.s32.totalorder %s29, 1
      %p278 = scmp.ne.s32.totalorder %s273, %s275
      %p279 = scmp.eq.s32.totalorder %s29, 0
      %p280 = por %p278, %p279
      %p281 = scmp.ne.s32.totalorder %s273, %s275
      %p282 = scmp.eq.s32.totalorder %s34, 1
      %p283 = por %p281, %p282
      %p284 = scmp.ne.s32.totalorder %s275, %s276
      %p285 = scmp.eq.s32.totalorder %s34, 0
      %p286 = por %p284, %p285
      %p287 = scmp.ne.s32.totalorder %s275, %s276
      %p288 = scmp.eq.s32.totalorder %s35, 1
      %p289 = por %p287, %p288
      %p291 = scmp.ne.s32.totalorder %s276, %s290
      %p292 = scmp.eq.s32.totalorder %s35, 0
      %p293 = por %p291, %p292
      %s295 = sadd.s32 %s294, 1
      %p298 = scmp.eq.s32.totalorder %s29, 1
      %p299 = scmp.ne.s32.totalorder %s294, %s296
      %p300 = scmp.eq.s32.totalorder %s29, 0
      %p301 = por %p299, %p300
      %p302 = scmp.ne.s32.totalorder %s294, %s296
      %p303 = scmp.eq.s32.totalorder %s34, 1
      %p304 = por %p302, %p303
      %p305 = scmp.ne.s32.totalorder %s296, %s297
      %p306 = scmp.eq.s32.totalorder %s34, 0
      %p307 = por %p305, %p306
      %p308 = scmp.ne.s32.totalorder %s296, %s297
      %p309 = scmp.eq.s32.totalorder %s35, 1
      %p310 = por %p308, %p309
      %p312 = scmp.ne.s32.totalorder %s297, %s311
      %p313 = scmp.eq.s32.totalorder %s35, 0
      %p314 = por %p312, %p313
      %s316 = sadd.s32 %s315, 1
      %p319 = scmp.eq.s32.totalorder %s29, 1
      %p320 = scmp.ne.s32.totalorder %s315, %s317
      %p321 = scmp.eq.s32.totalorder %s29, 0
      %p322 = por %p320, %p321
      %p323 = scmp.ne.s32.totalorder %s315, %s317
      %p324 = scmp.eq.s32.totalorder %s34, 1
      %p325 = por %p323, %p324
      %p326 = scmp.ne.s32.totalorder %s317, %s318
      %p327 = scmp.eq.s32.totalorder %s34, 0
      %p328 = por %p326, %p327
      %p329 = scmp.ne.s32.totalorder %s317, %s318
      %p330 = scmp.eq.s32.totalorder %s35, 1
      %p331 = por %p329, %p330
      %p333 = scmp.ne.s32.totalorder %s318, %s332
      %p334 = scmp.eq.s32.totalorder %s35, 0
      %p335 = por %p333, %p334
      %s337 = sadd.s32 %s336, 1
      %p340 = scmp.eq.s32.totalorder %s29, 1
      %p341 = scmp.ne.s32.totalorder %s336, %s338
      %p342 = scmp.eq.s32.totalorder %s29, 0
      %p343 = por %p341, %p342
      %p344 = scmp.ne.s32.totalorder %s336, %s338
      %p345 = scmp.eq.s32.totalorder %s34, 1
      %p346 = por %p344, %p345
      %p347 = scmp.ne.s32.totalorder %s338, %s339
      %p348 = scmp.eq.s32.totalorder %s34, 0
      %p349 = por %p347, %p348
      %p350 = scmp.ne.s32.totalorder %s338, %s339
      %p351 = scmp.eq.s32.totalorder %s35, 1
      %p352 = por %p350, %p351
      %p354 = scmp.ne.s32.totalorder %s339, %s353
      %p355 = scmp.eq.s32.totalorder %s35, 0
      %p356 = por %p354, %p355
      %s358 = sadd.s32 %s357, 1
      %p361 = scmp.eq.s32.totalorder %s29, 1
      %p362 = scmp.ne.s32.totalorder %s357, %s359
      %p363 = scmp.eq.s32.totalorder %s29, 0
      %p364 = por %p362, %p363
      %p365 = scmp.ne.s32.totalorder %s357, %s359
      %p366 = scmp.eq.s32.totalorder %s34, 1
      %p367 = por %p365, %p366
      %p368 = scmp.ne.s32.totalorder %s359, %s360
      %p369 = scmp.eq.s32.totalorder %s34, 0
      %p370 = por %p368, %p369
      %p371 = scmp.ne.s32.totalorder %s359, %s360
      %p372 = scmp.eq.s32.totalorder %s35, 1
      %p373 = por %p371, %p372
      %p375 = scmp.ne.s32.totalorder %s360, %s374
      %p376 = scmp.eq.s32.totalorder %s35, 0
      %p377 = por %p375, %p376
      %s379 = sadd.s32 %s378, 1
      %p382 = scmp.eq.s32.totalorder %s29, 1
      %p383 = scmp.ne.s32.totalorder %s378, %s380
      %p384 = scmp.eq.s32.totalorder %s29, 0
      %p385 = por %p383, %p384
      %p386 = scmp.ne.s32.totalorder %s378, %s380
      %p387 = scmp.eq.s32.totalorder %s34, 1
      %p388 = por %p386, %p387
      %p389 = scmp.ne.s32.totalorder %s380, %s381
      %p390 = scmp.eq.s32.totalorder %s34, 0
      %p391 = por %p389, %p390
      %p392 = scmp.ne.s32.totalorder %s380, %s381
      %p393 = scmp.eq.s32.totalorder %s35, 1
      %p394 = por %p392, %p393
      %p396 = scmp.ne.s32.totalorder %s381, %s395
      %p397 = scmp.eq.s32.totalorder %s35, 0
      %p398 = por %p396, %p397
      %s399 = ssub.s32 %s29, %s36
      %p400 = scmp.eq.s32.totalorder %s399, 0
      %s402 = sadd.s32 %s401, 1
      %s403 = scalar_select %p400, %s401, %s402
      %p406 = pneg %p400
      %p407 = scmp.eq.s32.totalorder %s29, 1
      %p408 = por %p406, %p407
      %p409 = scmp.ne.s32.totalorder %s401, %s404
      %p410 = scmp.eq.s32.totalorder %s29, 0
      %p411 = por %p409, %p410
      %p412 = scmp.ne.s32.totalorder %s401, %s404
      %p413 = scmp.eq.s32.totalorder %s34, 1
      %p414 = por %p412, %p413
      %p415 = scmp.ne.s32.totalorder %s404, %s405
      %p416 = scmp.eq.s32.totalorder %s34, 0
      %p417 = por %p415, %p416
      %p418 = scmp.ne.s32.totalorder %s404, %s405
      %p419 = scmp.eq.s32.totalorder %s35, 1
      %p420 = por %p418, %p419
      %p422 = scmp.ne.s32.totalorder %s405, %s421
      %p423 = scmp.eq.s32.totalorder %s35, 0
      %p424 = por %p422, %p423
      %p425 = scmp.le.s32.totalorder 1, %s29
      %p426 = scmp.lt.s32.totalorder %s29, 3
      %p427 = pnand %p425, %p426
      %p428 = pneg %p427
      // Predicated region
      $region9: #{transformer_rationale_predictor.1} parent=5 // pred_check
        _
      $region10: #{transformer_rationale_predictor.1} parent=5 // pred_check_branch
        %430 = sbr.rel (%p427) target = $region12
      $region11: #{transformer_rationale_predictor.1} parent=5 // pred_region
        %s431 = ssub.s32 %s29, 1
        // Predicated region
        $region13: #{transformer_rationale_predictor.1} parent=11 // pred_check
          %p432 = pneg %p76
        $region14: #{transformer_rationale_predictor.1} parent=11 // pred_check_branch
          %434 = sbr.rel (%p432) target = $region16
        $region15: #{transformer_rationale_predictor.1} parent=11 // pred_region
          _
        $region16: #{transformer_rationale_predictor.1} parent=11 // pred_fallthru
          _
        // Predicated region
        $region17: #{transformer_rationale_predictor.1} parent=11 // pred_check
          %p435 = pneg %p97
        $region18: #{transformer_rationale_predictor.1} parent=11 // pred_check_branch
          %437 = sbr.rel (%p435) target = $region20
        $region19: #{transformer_rationale_predictor.1} parent=11 // pred_region
          _
        $region20: #{transformer_rationale_predictor.1} parent=11 // pred_fallthru
          _
        // Predicated region
        $region21: #{transformer_rationale_predictor.1} parent=11 // pred_check
          %p438 = pneg %p118
        $region22: #{transformer_rationale_predictor.1} parent=11 // pred_check_branch
          %440 = sbr.rel (%p438) target = $region24
        $region23: #{transformer_rationale_predictor.1} parent=11 // pred_region
          _
        $region24: #{transformer_rationale_predictor.1} parent=11 // pred_fallthru
          _
        // Predicated region
        $region25: #{transformer_rationale_predictor.1} parent=11 // pred_check
          %p441 = pneg %p139
        $region26: #{transformer_rationale_predictor.1} parent=11 // pred_check_branch
          %443 = sbr.rel (%p441) target = $region28
        $region27: #{transformer_rationale_predictor.1} parent=11 // pred_region
          _
        $region28: #{transformer_rationale_predictor.1} parent=11 // pred_fallthru
          _
        // Predicated region
        $region29: #{transformer_rationale_predictor.1} parent=11 // pred_check
          %p444 = pneg %p160
        $region30: #{transformer_rationale_predictor.1} parent=11 // pred_check_branch
          %446 = sbr.rel (%p444) target = $region32
        $region31: #{transformer_rationale_predictor.1} parent=11 // pred_region
          _
        $region32: #{transformer_rationale_predictor.1} parent=11 // pred_fallthru
          _
        // Predicated region
        $region33: #{transformer_rationale_predictor.1} parent=11 // pred_check
          %p447 = pneg %p181
        $region34: #{transformer_rationale_predictor.1} parent=11 // pred_check_branch
          %449 = sbr.rel (%p447) target = $region36
        $region35: #{transformer_rationale_predictor.1} parent=11 // pred_region
          _
        $region36: #{transformer_rationale_predictor.1} parent=11 // pred_fallthru
          _
        // Predicated region
        $region37: #{transformer_rationale_predictor.1} parent=11 // pred_check
          %p450 = pneg %p202
        $region38: #{transformer_rationale_predictor.1} parent=11 // pred_check_branch
          %452 = sbr.rel (%p450) target = $region40
        $region39: #{transformer_rationale_predictor.1} parent=11 // pred_region
          _
        $region40: #{transformer_rationale_predictor.1} parent=11 // pred_fallthru
          _
        // Predicated region
        $region41: #{transformer_rationale_predictor.1} parent=11 // pred_check
          %p453 = pneg %p223
        $region42: #{transformer_rationale_predictor.1} parent=11 // pred_check_branch
          %455 = sbr.rel (%p453) target = $region44
        $region43: #{transformer_rationale_predictor.1} parent=11 // pred_region
          %457 = vsyncadd [#allocation3], 0
          %s458 = sshll.u32 %s8, 4
          %s459 = int_to_ptr.hbm [resolvable:$true] %s458
          %s460 = sshll.u32 [#allocation2], 4
          %s461 = int_to_ptr.vmem [resolvable:$true] %s460
          %466 = dma.hbm_to_vmem [thread:$0]  %s459, 32, %s461, [#allocation3], 16, 16, 1
        $region44: #{transformer_rationale_predictor.1} parent=11 // pred_fallthru
          _
        // Predicated region
        $region45: #{transformer_rationale_predictor.1} parent=11 // pred_check
          %p467 = pneg %p244
        $region46: #{transformer_rationale_predictor.1} parent=11 // pred_check_branch
          %469 = sbr.rel (%p467) target = $region48
        $region47: #{transformer_rationale_predictor.1} parent=11 // pred_region
          _
        $region48: #{transformer_rationale_predictor.1} parent=11 // pred_fallthru
          _
        // Predicated region
        $region49: #{transformer_rationale_predictor.1} parent=11 // pred_check
          %p470 = pneg %p265
        $region50: #{transformer_rationale_predictor.1} parent=11 // pred_check_branch
          %472 = sbr.rel (%p470) target = $region52
        $region51: #{transformer_rationale_predictor.1} parent=11 // pred_region
          %474 = vsyncadd [#allocation6], 0
          %s475 = sshll.u32 %s10, 4
          %s476 = int_to_ptr.hbm [resolvable:$true] %s475
          %s477 = sshll.u32 [#allocation5], 4
          %s478 = int_to_ptr.vmem [resolvable:$true] %s477
          %483 = dma.hbm_to_vmem [thread:$0]  %s476, 32, %s478, [#allocation6], 16, 16, 1
        $region52: #{transformer_rationale_predictor.1} parent=11 // pred_fallthru
          _
        // Predicated region
        $region53: #{transformer_rationale_predictor.1} parent=11 // pred_check
          %p484 = pneg %p286
        $region54: #{transformer_rationale_predictor.1} parent=11 // pred_check_branch
          %486 = sbr.rel (%p484) target = $region56
        $region55: #{transformer_rationale_predictor.1} parent=11 // pred_region
          _
        $region56: #{transformer_rationale_predictor.1} parent=11 // pred_fallthru
          _
        // Predicated region
        $region57: #{transformer_rationale_predictor.1} parent=11 // pred_check
          %p487 = pneg %p307
        $region58: #{transformer_rationale_predictor.1} parent=11 // pred_check_branch
          %489 = sbr.rel (%p487) target = $region60
        $region59: #{transformer_rationale_predictor.1} parent=11 // pred_region
          %491 = vsyncadd [#allocation6], 0
          %s492 = sshll.u32 %s12, 4
          %s493 = int_to_ptr.hbm [resolvable:$true] %s492
          %s494 = sshll.u32 [#allocation7], 4
          %s495 = int_to_ptr.vmem [resolvable:$true] %s494
          %500 = dma.hbm_to_vmem [thread:$0]  %s493, 32, %s495, [#allocation6], 16, 16, 1
        $region60: #{transformer_rationale_predictor.1} parent=11 // pred_fallthru
          _
        // Predicated region
        $region61: #{transformer_rationale_predictor.1} parent=11 // pred_check
          %p501 = pneg %p328
        $region62: #{transformer_rationale_predictor.1} parent=11 // pred_check_branch
          %503 = sbr.rel (%p501) target = $region64
        $region63: #{transformer_rationale_predictor.1} parent=11 // pred_region
          _
        $region64: #{transformer_rationale_predictor.1} parent=11 // pred_fallthru
          _
        // Predicated region
        $region65: #{transformer_rationale_predictor.1} parent=11 // pred_check
          %p504 = pneg %p349
        $region66: #{transformer_rationale_predictor.1} parent=11 // pred_check_branch
          %506 = sbr.rel (%p504) target = $region68
        $region67: #{transformer_rationale_predictor.1} parent=11 // pred_region
          %508 = vsyncadd [#allocation9], 0
          %s509 = sshll.u32 %s14, 4
          %s510 = int_to_ptr.hbm [resolvable:$true] %s509
          %s511 = sshll.u32 [#allocation8], 4
          %s512 = int_to_ptr.vmem [resolvable:$true] %s511
          %517 = dma.hbm_to_vmem [thread:$0]  %s510, 32, %s512, [#allocation9], 16, 16, 1
        $region68: #{transformer_rationale_predictor.1} parent=11 // pred_fallthru
          _
        // Predicated region
        $region69: #{transformer_rationale_predictor.1} parent=11 // pred_check
          %p518 = pneg %p370
        $region70: #{transformer_rationale_predictor.1} parent=11 // pred_check_branch
          %520 = sbr.rel (%p518) target = $region72
        $region71: #{transformer_rationale_predictor.1} parent=11 // pred_region
          _
        $region72: #{transformer_rationale_predictor.1} parent=11 // pred_fallthru
          _
        // Predicated region
        $region73: #{transformer_rationale_predictor.1} parent=11 // pred_check
          %p521 = pneg %p391
        $region74: #{transformer_rationale_predictor.1} parent=11 // pred_check_branch
          %523 = sbr.rel (%p521) target = $region76
        $region75: #{transformer_rationale_predictor.1} parent=11 // pred_region
          %525 = vsyncadd [#allocation9], 0
          %s527 = sshll.u32 %s16, 4
          %s528 = int_to_ptr.hbm [resolvable:$true] %s527
          %s529 = sshll.u32 [#allocation10], 4
          %s530 = int_to_ptr.vmem [resolvable:$true] %s529
          %532 = dma.hbm_to_vmem [thread:$0]  %s528, 16, %s530, [#allocation9]
        $region76: #{transformer_rationale_predictor.1} parent=11 // pred_fallthru
          _
      $region12: #{transformer_rationale_predictor.1} parent=5 // pred_fallthru
        _
      %p533 = scmp.lt.s32.totalorder %s29, 2
      // Predicated region
      $region77: #{transformer_rationale_predictor.1} parent=5 // pred_check
        %p534 = pneg %p533
      $region78: #{transformer_rationale_predictor.1} parent=5 // pred_check_branch
        %536 = sbr.rel (%p534) target = $region80
      $region79: #{transformer_rationale_predictor.1} parent=5 // pred_region
        // Predicated region
        $region81: #{transformer_rationale_predictor.1} parent=79 // pred_check
          %p537 = pneg %p49
        $region82: #{transformer_rationale_predictor.1} parent=79 // pred_check_branch
          %539 = sbr.rel (%p537) target = $region84
        $region83: #{transformer_rationale_predictor.1} parent=79 // pred_region
          %p540 = scmp.lt.s32.totalorder %s29, 1
          %s541 = scalar_select %p540, %s29, 1
          %s542 = smul.addr %s541, 8
          %s543 = scalar_lea.vmem %s0, %s542
        $region84: #{transformer_rationale_predictor.1} parent=79 // pred_fallthru
          _
      $region80: #{transformer_rationale_predictor.1} parent=5 // pred_fallthru
        _
      %p544 = scmp.le.s32.totalorder 1, %s29
      %p545 = scmp.lt.s32.totalorder %s29, 3
      %p546 = pnand %p544, %p545
      %p547 = pneg %p546
      // Predicated region
      $region85: #{transformer_rationale_predictor.1} parent=5 // pred_check
        _
      $region86: #{transformer_rationale_predictor.1} parent=5 // pred_check_branch
        %549 = sbr.rel (%p546) target = $region88
      $region87: #{transformer_rationale_predictor.1} parent=5 // pred_region
        %s550 = ssub.s32 %s29, 1
        // Predicated region
        $region89: #{transformer_rationale_predictor.1} parent=87 // pred_check
          %p551 = pneg %p223
        $region90: #{transformer_rationale_predictor.1} parent=87 // pred_check_branch
          %553 = sbr.rel (%p551) target = $region92
        $region91: #{transformer_rationale_predictor.1} parent=87 // pred_region
          %555 = dma.done [#allocation3], 32
        $region92: #{transformer_rationale_predictor.1} parent=87 // pred_fallthru
          _
        // Predicated region
        $region93: #{transformer_rationale_predictor.1} parent=87 // pred_check
          %p556 = pneg %p265
        $region94: #{transformer_rationale_predictor.1} parent=87 // pred_check_branch
          %558 = sbr.rel (%p556) target = $region96
        $region95: #{transformer_rationale_predictor.1} parent=87 // pred_region
          %560 = dma.done [#allocation6], 32
        $region96: #{transformer_rationale_predictor.1} parent=87 // pred_fallthru
          _
        // Predicated region
        $region97: #{transformer_rationale_predictor.1} parent=87 // pred_check
          %p561 = pneg %p307
        $region98: #{transformer_rationale_predictor.1} parent=87 // pred_check_branch
          %563 = sbr.rel (%p561) target = $region100
        $region99: #{transformer_rationale_predictor.1} parent=87 // pred_region
          %565 = dma.done [#allocation6], 32
        $region100: #{transformer_rationale_predictor.1} parent=87 // pred_fallthru
          _
        // Predicated region
        $region101: #{transformer_rationale_predictor.1} parent=87 // pred_check
          %p566 = pneg %p349
        $region102: #{transformer_rationale_predictor.1} parent=87 // pred_check_branch
          %568 = sbr.rel (%p566) target = $region104
        $region103: #{transformer_rationale_predictor.1} parent=87 // pred_region
          %570 = dma.done [#allocation9], 32
        $region104: #{transformer_rationale_predictor.1} parent=87 // pred_fallthru
          _
        // Predicated region
        $region105: #{transformer_rationale_predictor.1} parent=87 // pred_check
          %p571 = pneg %p391
        $region106: #{transformer_rationale_predictor.1} parent=87 // pred_check_branch
          %573 = sbr.rel (%p571) target = $region108
        $region107: #{transformer_rationale_predictor.1} parent=87 // pred_region
          %575 = dma.done [#allocation9], 16
        $region108: #{transformer_rationale_predictor.1} parent=87 // pred_fallthru
          _
        %p576 = scmp.lt.s32.totalorder %s34, 1
        %s577 = scalar_select %p576, %s34, 1
        %s578 = smul.addr %s577, 8
        %s579 = scalar_lea.vmem %s0, %s578
        %p580 = pneg %p55
        %p581 = pneg %p52
        %p582 = pneg %p76
        %p583 = pneg %p73
        %p584 = pneg %p97
        %p585 = pneg %p94
        %p586 = pneg %p118
        %p587 = pneg %p115
        %p588 = pneg %p139
        %p589 = pneg %p136
        %p590 = pneg %p160
        %p591 = pneg %p157
        %p592 = pneg %p181
        %p593 = pneg %p178
        %p594 = pneg %p202
        %p595 = pneg %p199
        %p596 = pneg %p223
        %p597 = pneg %p220
        %p598 = pneg %p244
        %p599 = pneg %p241
        %p600 = pneg %p265
        %p601 = pneg %p262
        %p602 = pneg %p286
        %p603 = pneg %p283
        %p604 = pneg %p307
        %p605 = pneg %p304
        %p606 = pneg %p328
        %p607 = pneg %p325
        %p608 = pneg %p349
        %p609 = pneg %p346
        %p610 = pneg %p370
        %p611 = pneg %p367
        %p612 = pneg %p391
        %p613 = pneg %p388
        %p614 = pneg %p417
        %p615 = pneg %p414
        %s616 = sand.u32 %s404, 1
        %s617 = scalar_lea.sflag [#allocation4], %s616
        %s618 = sand.u32 %s404, 1
        %s619 = smul.addr %s618, 8
        %s620 = scalar_lea.vmem [#allocation11], %s619
        %p621 = scmp.lt.s32.totalorder %s34, 1
        %s622 = scalar_select %p621, %s34, 1
        %s623 = smul.addr %s622, 8
        %s624 = scalar_lea.vmem %s0, %s623
        %v626 = vld [vmem:[%s624] sm:$0xff]
        %v627 = vpack.c.bf16 %v626, %v626
        %v628 = vld [vmem:[%s1] sm:$0xf]
        %v629 = vld [vmem:[%s2] sm:$0x1]
        %v631 = vperm.slane %v629, 0
        %vm633 = vcmask 64512
        %v635 = vsel %vm633, %v627, 0
        %vm637 = vcmask 1043456
        %v639 = vsel %vm637, %v628, 0
        %641 = vmatpush.bf16.msra.mxu0 0
        %642 = vmatpush.bf16.msra.mxu0 0
        %643 = vmatpush.bf16.msra.mxu0 0
        %644 = vmatpush.bf16.msra.mxu0 0
        %645 = vmatpush.bf16.msra.mxu0 0
        %646 = vmatpush.bf16.msra.mxu0 0
        %647 = vmatpush.bf16.msra.mxu0 0
        %648 = vmatpush.bf16.msra.mxu0 %v639
        %649 = vmatmul.bf16.gmra.mxu0 %v635
        %v650 = vpop.f32.mrf.mxu0
        %v651 = vadd.f32 %v631, %v650
        %v652 = vpop.f32.mrf.mxu0
        %653 = vdwg.mxu0
        %v654 = vpack.c.bf16 %v651, %v651
        %v655 = vld [vmem:[%s3] sm:$0xf]
        %v656 = vld [vmem:[%s3 + $0x4] sm:$0xf]
        %v657 = vld [vmem:[%s3 + $0x8] sm:$0xf]
        %v658 = vld [vmem:[%s3 + $0xc] sm:$0xf]
        %v659 = vld [vmem:[%s4] sm:$0x1]
        %v661 = vperm.slane %v659, 0
        %v667 = vunpack.c.l.b16 %v655
        %v668 = vunpack.c.l.b16 %v656
        %v669 = vunpack.c.l.b16 %v657
        %v670 = vunpack.c.l.b16 %v658
        %v671 = vpack.c.b16 %v668, %v667
        %v672 = vpack.c.b16 %v670, %v669
        %vm675 = vcmask 261120
        %v677 = vsel %vm675, %v654, 0
        %679 = vmatpush.bf16.msra.mxu0 0
        %680 = vmatpush.bf16.msra.mxu0 0
        %681 = vmatpush.bf16.msra.mxu0 0
        %682 = vmatpush.bf16.msra.mxu0 0
        %683 = vmatpush.bf16.msra.mxu0 0
        %684 = vmatpush.bf16.msra.mxu0 0
        %685 = vmatpush.bf16.msra.mxu0 %v672
        %686 = vmatpush.bf16.msra.mxu0 %v671
        %687 = vmatmul.bf16.gmra.mxu0 %v677
        %v688 = vpop.f32.mrf.mxu0
        %v689 = vadd.f32 %v661, %v688
        %v690 = vpop.f32.mrf.mxu0
        %691 = vdwg.mxu0
        %v692 = vld [vmem:[%s5] sm:$0xf]
        %v693 = vld [vmem:[%s5 + $0x4] sm:$0xf]
        %v694 = vld [vmem:[%s5 + $0x8] sm:$0xf]
        %v695 = vld [vmem:[%s5 + $0xc] sm:$0xf]
        %v696 = vmul.f32 %v689, 0.35355338
        %v697 = vpack.c.bf16 %v696, %v696
        %v698 = vpack.c.bf16 %v689, %v689
        %700 = vrot.lane.b32.xlu0 %v698, 96
        %v701 = vpop.permute.xlu0 %700
        %v703 = vsel %vm633, %v697, 0
        %v706 = vsel %vm633, %v701, 0
        %708 = vmatpush.bf16.xpose.msra.mxu0 0
        %709 = vmatpush.bf16.xpose.msra.mxu0 0
        %710 = vmatpush.bf16.xpose.msra.mxu0 0
        %711 = vmatpush.bf16.xpose.msra.mxu0 0
        %712 = vmatpush.bf16.xpose.msra.mxu0 0
        %713 = vmatpush.bf16.xpose.msra.mxu0 0
        %714 = vmatpush.bf16.xpose.msra.mxu0 0
        %715 = vmatpush.bf16.xpose.msra.mxu0 %v706
        %716 = vmatmul.bf16.gmra.mxu0 %v703
        %v717 = vpop.f32.mrf.mxu0
        %v718 = vadd.f32 0.0, %v717
        %v719 = vpop.f32.mrf.mxu0
        %720 = vdwg.mxu0
        %v721 = vsel %vm633, %v718, -inf
        %722 = vmax.xlane.f32.xlu0 %v721
        %v723 = vpop.xlane.xlu0 %722
        %v724 = vsub.f32 %v718, %v723
        %v725 = vmul.f32 %v724, 1.442695
        %v726 = vpow.pop %v725
        %v727 = vsel %vm633, %v726, 0.0
        %728 = vadd.xlane.f32.xlu0 %v727
        %v729 = vpop.xlane.xlu0 %728
        %v730 = vrcp.pop %v729
        %v731 = vmul.f32 %v726, %v730
        %v732 = vpack.c.bf16 %v731, %v731
        %733 = vrot.lane.b32.xlu0 %v698, 64
        %v734 = vpop.permute.xlu0 %733
        %v736 = vsel %vm633, %v732, 0
        %v739 = vsel %vm637, %v734, 0
        %741 = vmatpush.bf16.msra.mxu0 0
        %742 = vmatpush.bf16.msra.mxu0 0
        %743 = vmatpush.bf16.msra.mxu0 0
        %744 = vmatpush.bf16.msra.mxu0 0
        %745 = vmatpush.bf16.msra.mxu0 0
        %746 = vmatpush.bf16.msra.mxu0 0
        %747 = vmatpush.bf16.msra.mxu0 0
        %748 = vmatpush.bf16.msra.mxu0 %v739
        %749 = vmatmul.bf16.gmra.mxu0 %v736
        %v750 = vpop.f32.mrf.mxu0
        %v751 = vadd.f32 0.0, %v750
        %v752 = vpop.f32.mrf.mxu0
        %753 = vdwg.mxu0
        %v754 = vpack.c.bf16 %v751, %v751
        %756 = vrot.lane.b32.xlu0 %v697, 120
        %v757 = vpop.permute.xlu0 %756
        %758 = vrot.lane.b32.xlu0 %v698, 88
        %v759 = vpop.permute.xlu0 %758
        %v761 = vsel %vm633, %v757, 0
        %v764 = vsel %vm633, %v759, 0
        %766 = vmatpush.bf16.xpose.msra.mxu0 0
        %767 = vmatpush.bf16.xpose.msra.mxu0 0
        %768 = vmatpush.bf16.xpose.msra.mxu0 0
        %769 = vmatpush.bf16.xpose.msra.mxu0 0
        %770 = vmatpush.bf16.xpose.msra.mxu0 0
        %771 = vmatpush.bf16.xpose.msra.mxu0 0
        %772 = vmatpush.bf16.xpose.msra.mxu0 0
        %773 = vmatpush.bf16.xpose.msra.mxu0 %v764
        %774 = vmatmul.bf16.gmra.mxu0 %v761
        %v775 = vpop.f32.mrf.mxu0
        %v776 = vadd.f32 0.0, %v775
        %v777 = vpop.f32.mrf.mxu0
        %778 = vdwg.mxu0
        %v779 = vsel %vm633, %v776, -inf
        %780 = vmax.xlane.f32.xlu0 %v779
        %v781 = vpop.xlane.xlu0 %780
        %v782 = vsub.f32 %v776, %v781
        %v783 = vmul.f32 %v782, 1.442695
        %v784 = vpow.pop %v783
        %v785 = vsel %vm633, %v784, 0.0
        %786 = vadd.xlane.f32.xlu0 %v785
        %v787 = vpop.xlane.xlu0 %786
        %v788 = vrcp.pop %v787
        %v789 = vmul.f32 %v784, %v788
        %v790 = vpack.c.bf16 %v789, %v789
        %791 = vrot.lane.b32.xlu0 %v698, 56
        %v792 = vpop.permute.xlu0 %791
        %v794 = vsel %vm633, %v790, 0
        %v797 = vsel %vm637, %v792, 0
        %799 = vmatpush.bf16.msra.mxu0 0
        %800 = vmatpush.bf16.msra.mxu0 0
        %801 = vmatpush.bf16.msra.mxu0 0
        %802 = vmatpush.bf16.msra.mxu0 0
        %803 = vmatpush.bf16.msra.mxu0 0
        %804 = vmatpush.bf16.msra.mxu0 0
        %805 = vmatpush.bf16.msra.mxu0 0
        %806 = vmatpush.bf16.msra.mxu0 %v797
        %807 = vmatmul.bf16.gmra.mxu0 %v794
        %v808 = vpop.f32.mrf.mxu0
        %v809 = vadd.f32 0.0, %v808
        %v810 = vpop.f32.mrf.mxu0
        %811 = vdwg.mxu0
        %v812 = vpack.c.bf16 %v809, %v809
        %v814 = vsel %vm633, %v812, 0
        %v817 = vsel %vm637, %v693, 0
        %819 = vmatpush.bf16.msra.mxu0 0
        %820 = vmatpush.bf16.msra.mxu0 0
        %821 = vmatpush.bf16.msra.mxu0 0
        %822 = vmatpush.bf16.msra.mxu0 0
        %823 = vmatpush.bf16.msra.mxu0 0
        %824 = vmatpush.bf16.msra.mxu0 0
        %825 = vmatpush.bf16.msra.mxu0 0
        %826 = vmatpush.bf16.msra.mxu0 %v817
        %827 = vmatmul.bf16.gmra.mxu0 %v814
        %v828 = vpop.f32.mrf.mxu0
        %v829 = vadd.f32 0.0, %v828
        %v830 = vpop.f32.mrf.mxu0
        %831 = vdwg.mxu0
        %v833 = vsel %vm633, %v754, 0
        %v836 = vsel %vm637, %v692, 0
        %838 = vmatpush.bf16.msra.mxu0 0
        %839 = vmatpush.bf16.msra.mxu0 0
        %840 = vmatpush.bf16.msra.mxu0 0
        %841 = vmatpush.bf16.msra.mxu0 0
        %842 = vmatpush.bf16.msra.mxu0 0
        %843 = vmatpush.bf16.msra.mxu0 0
        %844 = vmatpush.bf16.msra.mxu0 0
        %845 = vmatpush.bf16.msra.mxu0 %v836
        %846 = vmatmul.bf16.gmra.mxu0 %v833
        %v847 = vpop.f32.mrf.mxu0
        %v848 = vadd.f32 %v829, %v847
        %v849 = vpop.f32.mrf.mxu0
        %850 = vdwg.mxu0
        %851 = vrot.lane.b32.xlu0 %v697, 112
        %v852 = vpop.permute.xlu0 %851
        %853 = vrot.lane.b32.xlu0 %v698, 80
        %v854 = vpop.permute.xlu0 %853
        %v856 = vsel %vm633, %v852, 0
        %v859 = vsel %vm633, %v854, 0
        %861 = vmatpush.bf16.xpose.msra.mxu0 0
        %862 = vmatpush.bf16.xpose.msra.mxu0 0
        %863 = vmatpush.bf16.xpose.msra.mxu0 0
        %864 = vmatpush.bf16.xpose.msra.mxu0 0
        %865 = vmatpush.bf16.xpose.msra.mxu0 0
        %866 = vmatpush.bf16.xpose.msra.mxu0 0
        %867 = vmatpush.bf16.xpose.msra.mxu0 0
        %868 = vmatpush.bf16.xpose.msra.mxu0 %v859
        %869 = vmatmul.bf16.gmra.mxu0 %v856
        %v870 = vpop.f32.mrf.mxu0
        %v871 = vadd.f32 0.0, %v870
        %v872 = vpop.f32.mrf.mxu0
        %873 = vdwg.mxu0
        %v874 = vsel %vm633, %v871, -inf
        %875 = vmax.xlane.f32.xlu0 %v874
        %v876 = vpop.xlane.xlu0 %875
        %v877 = vsub.f32 %v871, %v876
        %v878 = vmul.f32 %v877, 1.442695
        %v879 = vpow.pop %v878
        %v880 = vsel %vm633, %v879, 0.0
        %881 = vadd.xlane.f32.xlu0 %v880
        %v882 = vpop.xlane.xlu0 %881
        %v883 = vrcp.pop %v882
        %v884 = vmul.f32 %v879, %v883
        %v885 = vpack.c.bf16 %v884, %v884
        %886 = vrot.lane.b32.xlu0 %v698, 48
        %v887 = vpop.permute.xlu0 %886
        %v889 = vsel %vm633, %v885, 0
        %v892 = vsel %vm637, %v887, 0
        %894 = vmatpush.bf16.msra.mxu0 0
        %895 = vmatpush.bf16.msra.mxu0 0
        %896 = vmatpush.bf16.msra.mxu0 0
        %897 = vmatpush.bf16.msra.mxu0 0
        %898 = vmatpush.bf16.msra.mxu0 0
        %899 = vmatpush.bf16.msra.mxu0 0
        %900 = vmatpush.bf16.msra.mxu0 0
        %901 = vmatpush.bf16.msra.mxu0 %v892
        %902 = vmatmul.bf16.gmra.mxu0 %v889
        %v903 = vpop.f32.mrf.mxu0
        %v904 = vadd.f32 0.0, %v903
        %v905 = vpop.f32.mrf.mxu0
        %906 = vdwg.mxu0
        %v907 = vpack.c.bf16 %v904, %v904
        %v909 = vsel %vm633, %v907, 0
        %v912 = vsel %vm637, %v694, 0
        %914 = vmatpush.bf16.msra.mxu0 0
        %915 = vmatpush.bf16.msra.mxu0 0
        %916 = vmatpush.bf16.msra.mxu0 0
        %917 = vmatpush.bf16.msra.mxu0 0
        %918 = vmatpush.bf16.msra.mxu0 0
        %919 = vmatpush.bf16.msra.mxu0 0
        %920 = vmatpush.bf16.msra.mxu0 0
        %921 = vmatpush.bf16.msra.mxu0 %v912
        %922 = vmatmul.bf16.gmra.mxu0 %v909
        %v923 = vpop.f32.mrf.mxu0
        %v924 = vadd.f32 0.0, %v923
        %v925 = vpop.f32.mrf.mxu0
        %926 = vdwg.mxu0
        %v927 = vadd.f32 %v848, %v924
        %928 = vrot.lane.b32.xlu0 %v697, 104
        %v929 = vpop.permute.xlu0 %928
        %930 = vrot.lane.b32.xlu0 %v698, 72
        %v931 = vpop.permute.xlu0 %930
        %v933 = vsel %vm633, %v929, 0
        %v936 = vsel %vm633, %v931, 0
        %938 = vmatpush.bf16.xpose.msra.mxu0 0
        %939 = vmatpush.bf16.xpose.msra.mxu0 0
        %940 = vmatpush.bf16.xpose.msra.mxu0 0
        %941 = vmatpush.bf16.xpose.msra.mxu0 0
        %942 = vmatpush.bf16.xpose.msra.mxu0 0
        %943 = vmatpush.bf16.xpose.msra.mxu0 0
        %944 = vmatpush.bf16.xpose.msra.mxu0 0
        %945 = vmatpush.bf16.xpose.msra.mxu0 %v936
        %946 = vmatmul.bf16.gmra.mxu0 %v933
        %v947 = vpop.f32.mrf.mxu0
        %v948 = vadd.f32 0.0, %v947
        %v949 = vpop.f32.mrf.mxu0
        %950 = vdwg.mxu0
        %v951 = vsel %vm633, %v948, -inf
        %952 = vmax.xlane.f32.xlu0 %v951
        %v953 = vpop.xlane.xlu0 %952
        %v954 = vsub.f32 %v948, %v953
        %v955 = vmul.f32 %v954, 1.442695
        %v956 = vpow.pop %v955
        %v957 = vsel %vm633, %v956, 0.0
        %958 = vadd.xlane.f32.xlu0 %v957
        %v959 = vpop.xlane.xlu0 %958
        %v960 = vrcp.pop %v959
        %v961 = vmul.f32 %v956, %v960
        %v962 = vpack.c.bf16 %v961, %v961
        %963 = vrot.lane.b32.xlu0 %v698, 40
        %v964 = vpop.permute.xlu0 %963
        %v966 = vsel %vm633, %v962, 0
        %v969 = vsel %vm637, %v964, 0
        %971 = vmatpush.bf16.msra.mxu0 0
        %972 = vmatpush.bf16.msra.mxu0 0
        %973 = vmatpush.bf16.msra.mxu0 0
        %974 = vmatpush.bf16.msra.mxu0 0
        %975 = vmatpush.bf16.msra.mxu0 0
        %976 = vmatpush.bf16.msra.mxu0 0
        %977 = vmatpush.bf16.msra.mxu0 0
        %978 = vmatpush.bf16.msra.mxu0 %v969
        %979 = vmatmul.bf16.gmra.mxu0 %v966
        %v980 = vpop.f32.mrf.mxu0
        %v981 = vadd.f32 0.0, %v980
        %v982 = vpop.f32.mrf.mxu0
        %983 = vdwg.mxu0
        %v984 = vpack.c.bf16 %v981, %v981
        %v986 = vsel %vm633, %v984, 0
        %v989 = vsel %vm637, %v695, 0
        %991 = vmatpush.bf16.msra.mxu0 0
        %992 = vmatpush.bf16.msra.mxu0 0
        %993 = vmatpush.bf16.msra.mxu0 0
        %994 = vmatpush.bf16.msra.mxu0 0
        %995 = vmatpush.bf16.msra.mxu0 0
        %996 = vmatpush.bf16.msra.mxu0 0
        %997 = vmatpush.bf16.msra.mxu0 0
        %998 = vmatpush.bf16.msra.mxu0 %v989
        %999 = vmatmul.bf16.gmra.mxu0 %v986
        %v1000 = vpop.f32.mrf.mxu0
        %v1001 = vadd.f32 0.0, %v1000
        %v1002 = vpop.f32.mrf.mxu0
        %1003 = vdwg.mxu0
        %v1004 = vadd.f32 %v927, %v1001
        %v1005 = vld [vmem:[%s6] sm:$0x1]
        %v1007 = vperm.slane %v1005, 0
        %v1009 = vadd.f32 %v1004, %v1007
        %v1010 = vadd.f32 %v651, %v1009
        %v1011 = vld [vmem:[%s7] sm:$0x1]
        %v1012 = vld [vmem:[#allocation2] sm:$0x1]
        %v1013 = vsel %vm675, %v1010, 0.0
        %1014 = vadd.xlane.f32.xlu0 %v1013
        %v1015 = vpop.xlane.xlu0 %1014
        %v1016 = vrcp.pop 32.0
        %v1017 = vmul.f32 32.0, %v1016
        %v1018 = vsub.f32 1.0, %v1017
        %v1019 = vmul.f32 %v1016, %v1018
        %v1020 = vadd.f32 %v1016, %v1019
        %vm1021 = vweird.f32 %v1016
        %v1022 = vsel %vm1021, %v1016, %v1020
        %v1023 = vmul.f32 %v1015, %v1022
        %v1024 = vsub.f32 %v1010, %v1023
        %v1025 = vmul.f32 %v1024, %v1024
        %v1026 = vsel %vm675, %v1025, 0.0
        %1027 = vadd.xlane.f32.xlu0 %v1026
        %v1028 = vpop.xlane.xlu0 %1027
        %v1029 = vmul.f32 %v1028, %v1022
        %v1030 = vadd.f32 %v1029, 1e-05
        %v1031 = vrsqrt.pop %v1030
        %v1032 = vmul.f32 %v1031, %v1030
        %v1033 = vmul.f32 %v1032, %v1031
        %v1034 = vmul.f32 0.5, %v1033
        %v1035 = vsub.f32 1.5, %v1034
        %v1036 = vmul.f32 %v1031, %v1035
        %vm1037 = vweird.f32 %v1030
        %vm1038 = vweird.f32 %v1031
        %vm1039 = vmor %vm1037, %vm1038
        %v1040 = vsel %vm1039, %v1031, %v1036
        %v1041 = vmul.f32 %v1024, %v1040
        %v1043 = vperm.slane %v1011, 0
        %v1045 = vmul.f32 %v1041, %v1043
        %v1047 = vperm.slane %v1012, 0
        %v1049 = vadd.f32 %v1045, %v1047
        %v1050 = vpack.c.bf16 %v1049, %v1049
        %v1051 = vld [vmem:[%s9] sm:$0xf]
        %v1052 = vld [vmem:[%s9 + $0x4] sm:$0xf]
        %v1053 = vld [vmem:[%s9 + $0x8] sm:$0xf]
        %v1054 = vld [vmem:[%s9 + $0xc] sm:$0xf]
        %v1055 = vld [vmem:[#allocation5] sm:$0x1]
        %v1057 = vperm.slane %v1055, 0
        %v1063 = vunpack.c.l.b16 %v1051
        %v1064 = vunpack.c.l.b16 %v1052
        %v1065 = vunpack.c.l.b16 %v1053
        %v1066 = vunpack.c.l.b16 %v1054
        %v1067 = vpack.c.b16 %v1064, %v1063
        %v1068 = vpack.c.b16 %v1066, %v1065
        %v1072 = vsel %vm675, %v1050, 0
        %1074 = vmatpush.bf16.msra.mxu0 0
        %1075 = vmatpush.bf16.msra.mxu0 0
        %1076 = vmatpush.bf16.msra.mxu0 0
        %1077 = vmatpush.bf16.msra.mxu0 0
        %1078 = vmatpush.bf16.msra.mxu0 0
        %1079 = vmatpush.bf16.msra.mxu0 0
        %1080 = vmatpush.bf16.msra.mxu0 %v1068
        %1081 = vmatpush.bf16.msra.mxu0 %v1067
        %1082 = vmatmul.bf16.gmra.mxu0 %v1072
        %v1083 = vpop.f32.mrf.mxu0
        %v1084 = vadd.f32 %v1057, %v1083
        %v1085 = vpop.f32.mrf.mxu0
        %1086 = vdwg.mxu0
        %v1087 = vmax.f32 %v1084, 0.0
        %v1088 = vpack.c.bf16 %v1087, %v1087
        %v1089 = vld [vmem:[%s11] sm:$0xf]
        %v1090 = vld [vmem:[%s11 + $0x4] sm:$0xf]
        %v1091 = vld [vmem:[%s11 + $0x8] sm:$0xf]
        %v1092 = vld [vmem:[%s11 + $0xc] sm:$0xf]
        %v1093 = vld [vmem:[%s11 + $0x10] sm:$0xf]
        %v1094 = vld [vmem:[%s11 + $0x14] sm:$0xf]
        %v1095 = vld [vmem:[%s11 + $0x18] sm:$0xf]
        %v1096 = vld [vmem:[%s11 + $0x1c] sm:$0xf]
        %v1097 = vld [vmem:[#allocation7] sm:$0x1]
        %v1099 = vperm.slane %v1097, 0
        %v1109 = vunpack.c.l.b16 %v1089
        %v1110 = vunpack.c.l.b16 %v1090
        %v1111 = vunpack.c.l.b16 %v1091
        %v1112 = vunpack.c.l.b16 %v1092
        %v1113 = vunpack.c.l.b16 %v1093
        %v1114 = vunpack.c.l.b16 %v1094
        %v1115 = vunpack.c.l.b16 %v1095
        %v1116 = vunpack.c.l.b16 %v1096
        %v1117 = vpack.c.b16 %v1110, %v1109
        %v1118 = vpack.c.b16 %v1112, %v1111
        %v1119 = vpack.c.b16 %v1114, %v1113
        %v1120 = vpack.c.b16 %v1116, %v1115
        %vm1125 = vcmask 523264
        %v1127 = vsel %vm1125, %v1088, 0
        %1129 = vmatpush.bf16.msra.mxu0 0
        %1130 = vmatpush.bf16.msra.mxu0 0
        %1131 = vmatpush.bf16.msra.mxu0 0
        %1132 = vmatpush.bf16.msra.mxu0 0
        %1133 = vmatpush.bf16.msra.mxu0 %v1120
        %1134 = vmatpush.bf16.msra.mxu0 %v1119
        %1135 = vmatpush.bf16.msra.mxu0 %v1118
        %1136 = vmatpush.bf16.msra.mxu0 %v1117
        %1137 = vmatmul.bf16.gmra.mxu0 %v1127
        %v1138 = vpop.f32.mrf.mxu0
        %v1139 = vadd.f32 %v1099, %v1138
        %v1140 = vpop.f32.mrf.mxu0
        %1141 = vdwg.mxu0
        %v1142 = vadd.f32 %v1049, %v1139
        %v1143 = vld [vmem:[%s13] sm:$0x1]
        %v1144 = vld [vmem:[#allocation8] sm:$0x1]
        %v1145 = vsel %vm675, %v1142, 0.0
        %1146 = vadd.xlane.f32.xlu0 %v1145
        %v1147 = vpop.xlane.xlu0 %1146
        %v1148 = vmul.f32 %v1147, %v1022
        %v1149 = vsub.f32 %v1142, %v1148
        %v1150 = vmul.f32 %v1149, %v1149
        %v1151 = vsel %vm675, %v1150, 0.0
        %1152 = vadd.xlane.f32.xlu0 %v1151
        %v1153 = vpop.xlane.xlu0 %1152
        %v1154 = vmul.f32 %v1153, %v1022
        %v1155 = vadd.f32 %v1154, 1e-05
        %v1156 = vrsqrt.pop %v1155
        %v1157 = vmul.f32 %v1156, %v1155
        %v1158 = vmul.f32 %v1157, %v1156
        %v1159 = vmul.f32 0.5, %v1158
        %v1160 = vsub.f32 1.5, %v1159
        %v1161 = vmul.f32 %v1156, %v1160
        %vm1162 = vweird.f32 %v1155
        %vm1163 = vweird.f32 %v1156
        %vm1164 = vmor %vm1162, %vm1163
        %v1165 = vsel %vm1164, %v1156, %v1161
        %v1166 = vmul.f32 %v1149, %v1165
        %v1168 = vperm.slane %v1143, 0
        %v1170 = vmul.f32 %v1166, %v1168
        %v1172 = vperm.slane %v1144, 0
        %v1174 = vadd.f32 %v1170, %v1172
        %v1175 = vpack.c.bf16 %v1174, %v1174
        %s1176 = scalar_lea.vmem %s3, 16
        %v1177 = vld [vmem:[%s1176] sm:$0xf]
        %v1178 = vld [vmem:[%s1176 + $0x4] sm:$0xf]
        %v1179 = vld [vmem:[%s1176 + $0x8] sm:$0xf]
        %v1180 = vld [vmem:[%s1176 + $0xc] sm:$0xf]
        %s1181 = scalar_lea.vmem %s4, 1
        %v1182 = vld [vmem:[%s1181] sm:$0x1]
        %v1184 = vperm.slane %v1182, 0
        %v1190 = vunpack.c.l.b16 %v1177
        %v1191 = vunpack.c.l.b16 %v1178
        %v1192 = vunpack.c.l.b16 %v1179
        %v1193 = vunpack.c.l.b16 %v1180
        %v1194 = vpack.c.b16 %v1191, %v1190
        %v1195 = vpack.c.b16 %v1193, %v1192
        %v1199 = vsel %vm675, %v1175, 0
        %1201 = vmatpush.bf16.msra.mxu0 0
        %1202 = vmatpush.bf16.msra.mxu0 0
        %1203 = vmatpush.bf16.msra.mxu0 0
        %1204 = vmatpush.bf16.msra.mxu0 0
        %1205 = vmatpush.bf16.msra.mxu0 0
        %1206 = vmatpush.bf16.msra.mxu0 0
        %1207 = vmatpush.bf16.msra.mxu0 %v1195
        %1208 = vmatpush.bf16.msra.mxu0 %v1194
        %1209 = vmatmul.bf16.gmra.mxu0 %v1199
        %v1210 = vpop.f32.mrf.mxu0
        %v1211 = vadd.f32 %v1184, %v1210
        %v1212 = vpop.f32.mrf.mxu0
        %1213 = vdwg.mxu0
        %s1214 = scalar_lea.vmem %s5, 16
        %v1215 = vld [vmem:[%s1214] sm:$0xf]
        %v1216 = vld [vmem:[%s1214 + $0x4] sm:$0xf]
        %v1217 = vld [vmem:[%s1214 + $0x8] sm:$0xf]
        %v1218 = vld [vmem:[%s1214 + $0xc] sm:$0xf]
        %v1219 = vmul.f32 %v1211, 0.35355338
        %v1220 = vpack.c.bf16 %v1219, %v1219
        %v1221 = vpack.c.bf16 %v1211, %v1211
        %1223 = vrot.lane.b32.xlu0 %v1221, 96
        %v1224 = vpop.permute.xlu0 %1223
        %v1226 = vsel %vm633, %v1220, 0
        %v1229 = vsel %vm633, %v1224, 0
        %1231 = vmatpush.bf16.xpose.msra.mxu0 0
        %1232 = vmatpush.bf16.xpose.msra.mxu0 0
        %1233 = vmatpush.bf16.xpose.msra.mxu0 0
        %1234 = vmatpush.bf16.xpose.msra.mxu0 0
        %1235 = vmatpush.bf16.xpose.msra.mxu0 0
        %1236 = vmatpush.bf16.xpose.msra.mxu0 0
        %1237 = vmatpush.bf16.xpose.msra.mxu0 0
        %1238 = vmatpush.bf16.xpose.msra.mxu0 %v1229
        %1239 = vmatmul.bf16.gmra.mxu0 %v1226
        %v1240 = vpop.f32.mrf.mxu0
        %v1241 = vadd.f32 0.0, %v1240
        %v1242 = vpop.f32.mrf.mxu0
        %1243 = vdwg.mxu0
        %v1244 = vsel %vm633, %v1241, -inf
        %1245 = vmax.xlane.f32.xlu0 %v1244
        %v1246 = vpop.xlane.xlu0 %1245
        %v1247 = vsub.f32 %v1241, %v1246
        %v1248 = vmul.f32 %v1247, 1.442695
        %v1249 = vpow.pop %v1248
        %v1250 = vsel %vm633, %v1249, 0.0
        %1251 = vadd.xlane.f32.xlu0 %v1250
        %v1252 = vpop.xlane.xlu0 %1251
        %v1253 = vrcp.pop %v1252
        %v1254 = vmul.f32 %v1249, %v1253
        %v1255 = vpack.c.bf16 %v1254, %v1254
        %1256 = vrot.lane.b32.xlu0 %v1221, 64
        %v1257 = vpop.permute.xlu0 %1256
        %v1259 = vsel %vm633, %v1255, 0
        %v1262 = vsel %vm637, %v1257, 0
        %1264 = vmatpush.bf16.msra.mxu0 0
        %1265 = vmatpush.bf16.msra.mxu0 0
        %1266 = vmatpush.bf16.msra.mxu0 0
        %1267 = vmatpush.bf16.msra.mxu0 0
        %1268 = vmatpush.bf16.msra.mxu0 0
        %1269 = vmatpush.bf16.msra.mxu0 0
        %1270 = vmatpush.bf16.msra.mxu0 0
        %1271 = vmatpush.bf16.msra.mxu0 %v1262
        %1272 = vmatmul.bf16.gmra.mxu0 %v1259
        %v1273 = vpop.f32.mrf.mxu0
        %v1274 = vadd.f32 0.0, %v1273
        %v1275 = vpop.f32.mrf.mxu0
        %1276 = vdwg.mxu0
        %v1277 = vpack.c.bf16 %v1274, %v1274
        %1279 = vrot.lane.b32.xlu0 %v1220, 120
        %v1280 = vpop.permute.xlu0 %1279
        %1281 = vrot.lane.b32.xlu0 %v1221, 88
        %v1282 = vpop.permute.xlu0 %1281
        %v1284 = vsel %vm633, %v1280, 0
        %v1287 = vsel %vm633, %v1282, 0
        %1289 = vmatpush.bf16.xpose.msra.mxu0 0
        %1290 = vmatpush.bf16.xpose.msra.mxu0 0
        %1291 = vmatpush.bf16.xpose.msra.mxu0 0
        %1292 = vmatpush.bf16.xpose.msra.mxu0 0
        %1293 = vmatpush.bf16.xpose.msra.mxu0 0
        %1294 = vmatpush.bf16.xpose.msra.mxu0 0
        %1295 = vmatpush.bf16.xpose.msra.mxu0 0
        %1296 = vmatpush.bf16.xpose.msra.mxu0 %v1287
        %1297 = vmatmul.bf16.gmra.mxu0 %v1284
        %v1298 = vpop.f32.mrf.mxu0
        %v1299 = vadd.f32 0.0, %v1298
        %v1300 = vpop.f32.mrf.mxu0
        %1301 = vdwg.mxu0
        %v1302 = vsel %vm633, %v1299, -inf
        %1303 = vmax.xlane.f32.xlu0 %v1302
        %v1304 = vpop.xlane.xlu0 %1303
        %v1305 = vsub.f32 %v1299, %v1304
        %v1306 = vmul.f32 %v1305, 1.442695
        %v1307 = vpow.pop %v1306
        %v1308 = vsel %vm633, %v1307, 0.0
        %1309 = vadd.xlane.f32.xlu0 %v1308
        %v1310 = vpop.xlane.xlu0 %1309
        %v1311 = vrcp.pop %v1310
        %v1312 = vmul.f32 %v1307, %v1311
        %v1313 = vpack.c.bf16 %v1312, %v1312
        %1314 = vrot.lane.b32.xlu0 %v1221, 56
        %v1315 = vpop.permute.xlu0 %1314
        %v1317 = vsel %vm633, %v1313, 0
        %v1320 = vsel %vm637, %v1315, 0
        %1322 = vmatpush.bf16.msra.mxu0 0
        %1323 = vmatpush.bf16.msra.mxu0 0
        %1324 = vmatpush.bf16.msra.mxu0 0
        %1325 = vmatpush.bf16.msra.mxu0 0
        %1326 = vmatpush.bf16.msra.mxu0 0
        %1327 = vmatpush.bf16.msra.mxu0 0
        %1328 = vmatpush.bf16.msra.mxu0 0
        %1329 = vmatpush.bf16.msra.mxu0 %v1320
        %1330 = vmatmul.bf16.gmra.mxu0 %v1317
        %v1331 = vpop.f32.mrf.mxu0
        %v1332 = vadd.f32 0.0, %v1331
        %v1333 = vpop.f32.mrf.mxu0
        %1334 = vdwg.mxu0
        %v1335 = vpack.c.bf16 %v1332, %v1332
        %v1337 = vsel %vm633, %v1335, 0
        %v1340 = vsel %vm637, %v1216, 0
        %1342 = vmatpush.bf16.msra.mxu0 0
        %1343 = vmatpush.bf16.msra.mxu0 0
        %1344 = vmatpush.bf16.msra.mxu0 0
        %1345 = vmatpush.bf16.msra.mxu0 0
        %1346 = vmatpush.bf16.msra.mxu0 0
        %1347 = vmatpush.bf16.msra.mxu0 0
        %1348 = vmatpush.bf16.msra.mxu0 0
        %1349 = vmatpush.bf16.msra.mxu0 %v1340
        %1350 = vmatmul.bf16.gmra.mxu0 %v1337
        %v1351 = vpop.f32.mrf.mxu0
        %v1352 = vadd.f32 0.0, %v1351
        %v1353 = vpop.f32.mrf.mxu0
        %1354 = vdwg.mxu0
        %v1356 = vsel %vm633, %v1277, 0
        %v1359 = vsel %vm637, %v1215, 0
        %1361 = vmatpush.bf16.msra.mxu0 0
        %1362 = vmatpush.bf16.msra.mxu0 0
        %1363 = vmatpush.bf16.msra.mxu0 0
        %1364 = vmatpush.bf16.msra.mxu0 0
        %1365 = vmatpush.bf16.msra.mxu0 0
        %1366 = vmatpush.bf16.msra.mxu0 0
        %1367 = vmatpush.bf16.msra.mxu0 0
        %1368 = vmatpush.bf16.msra.mxu0 %v1359
        %1369 = vmatmul.bf16.gmra.mxu0 %v1356
        %v1370 = vpop.f32.mrf.mxu0
        %v1371 = vadd.f32 %v1352, %v1370
        %v1372 = vpop.f32.mrf.mxu0
        %1373 = vdwg.mxu0
        %1374 = vrot.lane.b32.xlu0 %v1220, 112
        %v1375 = vpop.permute.xlu0 %1374
        %1376 = vrot.lane.b32.xlu0 %v1221, 80
        %v1377 = vpop.permute.xlu0 %1376
        %v1379 = vsel %vm633, %v1375, 0
        %v1382 = vsel %vm633, %v1377, 0
        %1384 = vmatpush.bf16.xpose.msra.mxu0 0
        %1385 = vmatpush.bf16.xpose.msra.mxu0 0
        %1386 = vmatpush.bf16.xpose.msra.mxu0 0
        %1387 = vmatpush.bf16.xpose.msra.mxu0 0
        %1388 = vmatpush.bf16.xpose.msra.mxu0 0
        %1389 = vmatpush.bf16.xpose.msra.mxu0 0
        %1390 = vmatpush.bf16.xpose.msra.mxu0 0
        %1391 = vmatpush.bf16.xpose.msra.mxu0 %v1382
        %1392 = vmatmul.bf16.gmra.mxu0 %v1379
        %v1393 = vpop.f32.mrf.mxu0
        %v1394 = vadd.f32 0.0, %v1393
        %v1395 = vpop.f32.mrf.mxu0
        %1396 = vdwg.mxu0
        %v1397 = vsel %vm633, %v1394, -inf
        %1398 = vmax.xlane.f32.xlu0 %v1397
        %v1399 = vpop.xlane.xlu0 %1398
        %v1400 = vsub.f32 %v1394, %v1399
        %v1401 = vmul.f32 %v1400, 1.442695
        %v1402 = vpow.pop %v1401
        %v1403 = vsel %vm633, %v1402, 0.0
        %1404 = vadd.xlane.f32.xlu0 %v1403
        %v1405 = vpop.xlane.xlu0 %1404
        %v1406 = vrcp.pop %v1405
        %v1407 = vmul.f32 %v1402, %v1406
        %v1408 = vpack.c.bf16 %v1407, %v1407
        %1409 = vrot.lane.b32.xlu0 %v1221, 48
        %v1410 = vpop.permute.xlu0 %1409
        %v1412 = vsel %vm633, %v1408, 0
        %v1415 = vsel %vm637, %v1410, 0
        %1417 = vmatpush.bf16.msra.mxu0 0
        %1418 = vmatpush.bf16.msra.mxu0 0
        %1419 = vmatpush.bf16.msra.mxu0 0
        %1420 = vmatpush.bf16.msra.mxu0 0
        %1421 = vmatpush.bf16.msra.mxu0 0
        %1422 = vmatpush.bf16.msra.mxu0 0
        %1423 = vmatpush.bf16.msra.mxu0 0
        %1424 = vmatpush.bf16.msra.mxu0 %v1415
        %1425 = vmatmul.bf16.gmra.mxu0 %v1412
        %v1426 = vpop.f32.mrf.mxu0
        %v1427 = vadd.f32 0.0, %v1426
        %v1428 = vpop.f32.mrf.mxu0
        %1429 = vdwg.mxu0
        %v1430 = vpack.c.bf16 %v1427, %v1427
        %v1432 = vsel %vm633, %v1430, 0
        %v1435 = vsel %vm637, %v1217, 0
        %1437 = vmatpush.bf16.msra.mxu0 0
        %1438 = vmatpush.bf16.msra.mxu0 0
        %1439 = vmatpush.bf16.msra.mxu0 0
        %1440 = vmatpush.bf16.msra.mxu0 0
        %1441 = vmatpush.bf16.msra.mxu0 0
        %1442 = vmatpush.bf16.msra.mxu0 0
        %1443 = vmatpush.bf16.msra.mxu0 0
        %1444 = vmatpush.bf16.msra.mxu0 %v1435
        %1445 = vmatmul.bf16.gmra.mxu0 %v1432
        %v1446 = vpop.f32.mrf.mxu0
        %v1447 = vadd.f32 0.0, %v1446
        %v1448 = vpop.f32.mrf.mxu0
        %1449 = vdwg.mxu0
        %v1450 = vadd.f32 %v1371, %v1447
        %1451 = vrot.lane.b32.xlu0 %v1220, 104
        %v1452 = vpop.permute.xlu0 %1451
        %1453 = vrot.lane.b32.xlu0 %v1221, 72
        %v1454 = vpop.permute.xlu0 %1453
        %v1456 = vsel %vm633, %v1452, 0
        %v1459 = vsel %vm633, %v1454, 0
        %1461 = vmatpush.bf16.xpose.msra.mxu0 0
        %1462 = vmatpush.bf16.xpose.msra.mxu0 0
        %1463 = vmatpush.bf16.xpose.msra.mxu0 0
        %1464 = vmatpush.bf16.xpose.msra.mxu0 0
        %1465 = vmatpush.bf16.xpose.msra.mxu0 0
        %1466 = vmatpush.bf16.xpose.msra.mxu0 0
        %1467 = vmatpush.bf16.xpose.msra.mxu0 0
        %1468 = vmatpush.bf16.xpose.msra.mxu0 %v1459
        %1469 = vmatmul.bf16.gmra.mxu0 %v1456
        %v1470 = vpop.f32.mrf.mxu0
        %v1471 = vadd.f32 0.0, %v1470
        %v1472 = vpop.f32.mrf.mxu0
        %1473 = vdwg.mxu0
        %v1474 = vsel %vm633, %v1471, -inf
        %1475 = vmax.xlane.f32.xlu0 %v1474
        %v1476 = vpop.xlane.xlu0 %1475
        %v1477 = vsub.f32 %v1471, %v1476
        %v1478 = vmul.f32 %v1477, 1.442695
        %v1479 = vpow.pop %v1478
        %v1480 = vsel %vm633, %v1479, 0.0
        %1481 = vadd.xlane.f32.xlu0 %v1480
        %v1482 = vpop.xlane.xlu0 %1481
        %v1483 = vrcp.pop %v1482
        %v1484 = vmul.f32 %v1479, %v1483
        %v1485 = vpack.c.bf16 %v1484, %v1484
        %1486 = vrot.lane.b32.xlu0 %v1221, 40
        %v1487 = vpop.permute.xlu0 %1486
        %v1489 = vsel %vm633, %v1485, 0
        %v1492 = vsel %vm637, %v1487, 0
        %1494 = vmatpush.bf16.msra.mxu0 0
        %1495 = vmatpush.bf16.msra.mxu0 0
        %1496 = vmatpush.bf16.msra.mxu0 0
        %1497 = vmatpush.bf16.msra.mxu0 0
        %1498 = vmatpush.bf16.msra.mxu0 0
        %1499 = vmatpush.bf16.msra.mxu0 0
        %1500 = vmatpush.bf16.msra.mxu0 0
        %1501 = vmatpush.bf16.msra.mxu0 %v1492
        %1502 = vmatmul.bf16.gmra.mxu0 %v1489
        %v1503 = vpop.f32.mrf.mxu0
        %v1504 = vadd.f32 0.0, %v1503
        %v1505 = vpop.f32.mrf.mxu0
        %1506 = vdwg.mxu0
        %v1507 = vpack.c.bf16 %v1504, %v1504
        %v1509 = vsel %vm633, %v1507, 0
        %v1512 = vsel %vm637, %v1218, 0
        %1514 = vmatpush.bf16.msra.mxu0 0
        %1515 = vmatpush.bf16.msra.mxu0 0
        %1516 = vmatpush.bf16.msra.mxu0 0
        %1517 = vmatpush.bf16.msra.mxu0 0
        %1518 = vmatpush.bf16.msra.mxu0 0
        %1519 = vmatpush.bf16.msra.mxu0 0
        %1520 = vmatpush.bf16.msra.mxu0 0
        %1521 = vmatpush.bf16.msra.mxu0 %v1512
        %1522 = vmatmul.bf16.gmra.mxu0 %v1509
        %v1523 = vpop.f32.mrf.mxu0
        %v1524 = vadd.f32 0.0, %v1523
        %v1525 = vpop.f32.mrf.mxu0
        %1526 = vdwg.mxu0
        %v1527 = vadd.f32 %v1450, %v1524
        %s1528 = scalar_lea.vmem %s6, 1
        %v1529 = vld [vmem:[%s1528] sm:$0x1]
        %v1531 = vperm.slane %v1529, 0
        %v1533 = vadd.f32 %v1527, %v1531
        %v1534 = vadd.f32 %v1174, %v1533
        %s1535 = scalar_lea.vmem %s7, 1
        %v1536 = vld [vmem:[%s1535] sm:$0x1]
        %s1537 = scalar_lea.vmem [#allocation2], 1
        %v1538 = vld [vmem:[%s1537] sm:$0x1]
        %v1539 = vsel %vm675, %v1534, 0.0
        %1540 = vadd.xlane.f32.xlu0 %v1539
        %v1541 = vpop.xlane.xlu0 %1540
        %v1542 = vmul.f32 %v1541, %v1022
        %v1543 = vsub.f32 %v1534, %v1542
        %v1544 = vmul.f32 %v1543, %v1543
        %v1545 = vsel %vm675, %v1544, 0.0
        %1546 = vadd.xlane.f32.xlu0 %v1545
        %v1547 = vpop.xlane.xlu0 %1546
        %v1548 = vmul.f32 %v1547, %v1022
        %v1549 = vadd.f32 %v1548, 1e-05
        %v1550 = vrsqrt.pop %v1549
        %v1551 = vmul.f32 %v1550, %v1549
        %v1552 = vmul.f32 %v1551, %v1550
        %v1553 = vmul.f32 0.5, %v1552
        %v1554 = vsub.f32 1.5, %v1553
        %v1555 = vmul.f32 %v1550, %v1554
        %vm1556 = vweird.f32 %v1549
        %vm1557 = vweird.f32 %v1550
        %vm1558 = vmor %vm1556, %vm1557
        %v1559 = vsel %vm1558, %v1550, %v1555
        %v1560 = vmul.f32 %v1543, %v1559
        %v1562 = vperm.slane %v1536, 0
        %v1564 = vmul.f32 %v1560, %v1562
        %v1566 = vperm.slane %v1538, 0
        %v1568 = vadd.f32 %v1564, %v1566
        %v1569 = vpack.c.bf16 %v1568, %v1568
        %s1570 = scalar_lea.vmem %s9, 16
        %v1571 = vld [vmem:[%s1570] sm:$0xf]
        %v1572 = vld [vmem:[%s1570 + $0x4] sm:$0xf]
        %v1573 = vld [vmem:[%s1570 + $0x8] sm:$0xf]
        %v1574 = vld [vmem:[%s1570 + $0xc] sm:$0xf]
        %s1575 = scalar_lea.vmem [#allocation5], 1
        %v1576 = vld [vmem:[%s1575] sm:$0x1]
        %v1578 = vperm.slane %v1576, 0
        %v1584 = vunpack.c.l.b16 %v1571
        %v1585 = vunpack.c.l.b16 %v1572
        %v1586 = vunpack.c.l.b16 %v1573
        %v1587 = vunpack.c.l.b16 %v1574
        %v1588 = vpack.c.b16 %v1585, %v1584
        %v1589 = vpack.c.b16 %v1587, %v1586
        %v1593 = vsel %vm675, %v1569, 0
        %1595 = vmatpush.bf16.msra.mxu0 0
        %1596 = vmatpush.bf16.msra.mxu0 0
        %1597 = vmatpush.bf16.msra.mxu0 0
        %1598 = vmatpush.bf16.msra.mxu0 0
        %1599 = vmatpush.bf16.msra.mxu0 0
        %1600 = vmatpush.bf16.msra.mxu0 0
        %1601 = vmatpush.bf16.msra.mxu0 %v1589
        %1602 = vmatpush.bf16.msra.mxu0 %v1588
        %1603 = vmatmul.bf16.gmra.mxu0 %v1593
        %v1604 = vpop.f32.mrf.mxu0
        %v1605 = vadd.f32 %v1578, %v1604
        %v1606 = vpop.f32.mrf.mxu0
        %1607 = vdwg.mxu0
        %v1608 = vmax.f32 %v1605, 0.0
        %v1609 = vpack.c.bf16 %v1608, %v1608
        %s1610 = scalar_lea.vmem %s11, 32
        %v1611 = vld [vmem:[%s1610] sm:$0xf]
        %v1612 = vld [vmem:[%s1610 + $0x4] sm:$0xf]
        %v1613 = vld [vmem:[%s1610 + $0x8] sm:$0xf]
        %v1614 = vld [vmem:[%s1610 + $0xc] sm:$0xf]
        %v1615 = vld [vmem:[%s1610 + $0x10] sm:$0xf]
        %v1616 = vld [vmem:[%s1610 + $0x14] sm:$0xf]
        %v1617 = vld [vmem:[%s1610 + $0x18] sm:$0xf]
        %v1618 = vld [vmem:[%s1610 + $0x1c] sm:$0xf]
        %s1619 = scalar_lea.vmem [#allocation7], 1
        %v1620 = vld [vmem:[%s1619] sm:$0x1]
        %v1622 = vperm.slane %v1620, 0
        %v1632 = vunpack.c.l.b16 %v1611
        %v1633 = vunpack.c.l.b16 %v1612
        %v1634 = vunpack.c.l.b16 %v1613
        %v1635 = vunpack.c.l.b16 %v1614
        %v1636 = vunpack.c.l.b16 %v1615
        %v1637 = vunpack.c.l.b16 %v1616
        %v1638 = vunpack.c.l.b16 %v1617
        %v1639 = vunpack.c.l.b16 %v1618
        %v1640 = vpack.c.b16 %v1633, %v1632
        %v1641 = vpack.c.b16 %v1635, %v1634
        %v1642 = vpack.c.b16 %v1637, %v1636
        %v1643 = vpack.c.b16 %v1639, %v1638
        %v1649 = vsel %vm1125, %v1609, 0
        %1651 = vmatpush.bf16.msra.mxu0 0
        %1652 = vmatpush.bf16.msra.mxu0 0
        %1653 = vmatpush.bf16.msra.mxu0 0
        %1654 = vmatpush.bf16.msra.mxu0 0
        %1655 = vmatpush.bf16.msra.mxu0 %v1643
        %1656 = vmatpush.bf16.msra.mxu0 %v1642
        %1657 = vmatpush.bf16.msra.mxu0 %v1641
        %1658 = vmatpush.bf16.msra.mxu0 %v1640
        %1659 = vmatmul.bf16.gmra.mxu0 %v1649
        %v1660 = vpop.f32.mrf.mxu0
        %v1661 = vadd.f32 %v1622, %v1660
        %v1662 = vpop.f32.mrf.mxu0
        %1663 = vdwg.mxu0
        %v1664 = vadd.f32 %v1568, %v1661
        %s1665 = scalar_lea.vmem %s13, 1
        %v1666 = vld [vmem:[%s1665] sm:$0x1]
        %s1667 = scalar_lea.vmem [#allocation8], 1
        %v1668 = vld [vmem:[%s1667] sm:$0x1]
        %v1669 = vsel %vm675, %v1664, 0.0
        %1670 = vadd.xlane.f32.xlu0 %v1669
        %v1671 = vpop.xlane.xlu0 %1670
        %v1672 = vmul.f32 %v1671, %v1022
        %v1673 = vsub.f32 %v1664, %v1672
        %v1674 = vmul.f32 %v1673, %v1673
        %v1675 = vsel %vm675, %v1674, 0.0
        %1676 = vadd.xlane.f32.xlu0 %v1675
        %v1677 = vpop.xlane.xlu0 %1676
        %v1678 = vmul.f32 %v1677, %v1022
        %v1679 = vadd.f32 %v1678, 1e-05
        %v1680 = vrsqrt.pop %v1679
        %v1681 = vmul.f32 %v1680, %v1679
        %v1682 = vmul.f32 %v1681, %v1680
        %v1683 = vmul.f32 0.5, %v1682
        %v1684 = vsub.f32 1.5, %v1683
        %v1685 = vmul.f32 %v1680, %v1684
        %vm1686 = vweird.f32 %v1679
        %vm1687 = vweird.f32 %v1680
        %vm1688 = vmor %vm1686, %vm1687
        %v1689 = vsel %vm1688, %v1680, %v1685
        %v1690 = vmul.f32 %v1673, %v1689
        %v1692 = vperm.slane %v1666, 0
        %v1694 = vmul.f32 %v1690, %v1692
        %v1696 = vperm.slane %v1668, 0
        %v1698 = vadd.f32 %v1694, %v1696
        %v1699 = vpack.c.bf16 %v1698, %v1698
        %v1700 = vld [vmem:[%s15] sm:$0xf]
        %v1701 = vld [vmem:[%s15 + $0x4] sm:$0xf]
        %v1702 = vld [vmem:[%s15 + $0x8] sm:$0xf]
        %v1703 = vld [vmem:[%s15 + $0xc] sm:$0xf]
        %v1704 = vld [vmem:[#allocation10] sm:$0x1]
        %v1706 = vperm.slane %v1704, 0
        %v1712 = vunpack.c.l.b16 %v1700
        %v1713 = vunpack.c.l.b16 %v1701
        %v1714 = vunpack.c.l.b16 %v1702
        %v1715 = vunpack.c.l.b16 %v1703
        %v1716 = vpack.c.b16 %v1713, %v1712
        %v1717 = vpack.c.b16 %v1715, %v1714
        %v1721 = vsel %vm675, %v1699, 0
        %1723 = vmatpush.bf16.msra.mxu0 0
        %1724 = vmatpush.bf16.msra.mxu0 0
        %1725 = vmatpush.bf16.msra.mxu0 0
        %1726 = vmatpush.bf16.msra.mxu0 0
        %1727 = vmatpush.bf16.msra.mxu0 0
        %1728 = vmatpush.bf16.msra.mxu0 0
        %1729 = vmatpush.bf16.msra.mxu0 %v1717
        %1730 = vmatpush.bf16.msra.mxu0 %v1716
        %1731 = vmatmul.bf16.gmra.mxu0 %v1721
        %v1732 = vpop.f32.mrf.mxu0
        %v1733 = vadd.f32 %v1706, %v1732
        %v1734 = vpop.f32.mrf.mxu0
        %1735 = vdwg.mxu0
        %1736 = vst.msk [vmem:[%s620] sm:$0xff] %vm633, %v1733
        %s1737 = sand.u32 %s404, 1
        %s1738 = scalar_lea.sflag [#allocation4], %s1737
        %s1739 = sand.u32 %s404, 1
        %s1740 = smul.addr %s1739, 8
        %s1741 = scalar_lea.vmem [#allocation11], %s1740
        // Predicated region
        $region109: #{transformer_rationale_predictor.1} parent=87 // pred_check
          %p1742 = pneg %p414
        $region110: #{transformer_rationale_predictor.1} parent=87 // pred_check_branch
          %1744 = sbr.rel (%p1742) target = $region112
        $region111: #{transformer_rationale_predictor.1} parent=87 // pred_region
          %1746 = vsyncadd %s1738, 0
          %s1747 = smul.addr %s34, 8
          %s1748 = scalar_lea.hbm %s17, %s1747
          %s1750 = sshll.u32 %s1741, 4
          %s1751 = int_to_ptr.vmem [resolvable:$true] %s1750
          %s1752 = sshll.u32 %s1748, 4
          %s1753 = int_to_ptr.hbm [resolvable:$true] %s1752
          %1755 = dma.vmem_to_hbm [thread:$0]  %s1751, 128, %s1753, %s1738
        $region112: #{transformer_rationale_predictor.1} parent=87 // pred_fallthru
          _
      $region88: #{transformer_rationale_predictor.1} parent=5 // pred_fallthru
        _
      %p1756 = scmp.le.s32.totalorder 2, %s29
      // Predicated region
      $region113: #{transformer_rationale_predictor.1} parent=5 // pred_check
        %p1757 = pneg %p1756
      $region114: #{transformer_rationale_predictor.1} parent=5 // pred_check_branch
        %1759 = sbr.rel (%p1757) target = $region116
      $region115: #{transformer_rationale_predictor.1} parent=5 // pred_region
        %s1760 = ssub.s32 %s29, 2
        // Predicated region
        $region117: #{transformer_rationale_predictor.1} parent=115 // pred_check
          %p1761 = pneg %p420
        $region118: #{transformer_rationale_predictor.1} parent=115 // pred_check_branch
          %1763 = sbr.rel (%p1761) target = $region120
        $region119: #{transformer_rationale_predictor.1} parent=115 // pred_region
          %s1764 = sand.u32 %s405, 1
          %s1765 = scalar_lea.sflag [#allocation4], %s1764
          %s1766 = sand.u32 %s405, 1
          %s1767 = smul.addr %s1766, 8
          %s1768 = scalar_lea.vmem [#allocation11], %s1767
          %1770 = dma.done %s1765, 128
        $region120: #{transformer_rationale_predictor.1} parent=115 // pred_fallthru
          _
      $region116: #{transformer_rationale_predictor.1} parent=5 // pred_fallthru
        _
    $region6: #{transformer_rationale_predictor.1} parent=1 // loop_footer
      %s33 = sadd.s32 1, %s29
    $region7: #{transformer_rationale_predictor.1} parent=1 // loop_footer_branch
      %28 = sbr.rel target = $region3
    $region8: #{transformer_rationale_predictor.1} parent=1 // loop_exit
      _
    %1771 = vsyncpa [#allocation3], 1
    %s1772 = scalar_lea.sflag [#allocation3], 1
    %1773 = vsyncpa %s1772, 1
    %1774 = vsyncpa [#allocation6], 1
    %1775 = vsyncpa [#allocation9], 1
    %1776 = vsyncpa [#allocation4], 1
    %s1777 = scalar_lea.sflag [#allocation4], 1
    %1778 = vsyncpa %s1777, 1

</llo_original>
